<compile_context>
chip_gen: v7x
topology: tpu7x:2x2x1
jax: 0.10.0
libtpu: 0.0.40
codegen_flags: <defaults>
</compile_context>

<pallas_src>
import functools

import jax
import jax.numpy as jnp
from jax.experimental import pallas as pl
from jax.experimental.pallas import tpu as pltpu


def _make_lstm_kernel(hidden_dim: int, block_t: int):
    H = hidden_dim
    Tt = block_t

    def kernel(pg_ref, whh_ref, out_ref, h_scr, c_scr):
        tb = pl.program_id(0)

        # Reset the recurrent state at the first time-block (h0 = c0 = 0).
        @pl.when(tb == 0)
        def _():
            h_scr[...] = jnp.zeros_like(h_scr)
            c_scr[...] = jnp.zeros_like(c_scr)

        h = h_scr[...]                       # (B, H) f32
        c = c_scr[...]                       # (B, H) f32
        w = whh_ref[...]                     # (H, 4H), resident in VMEM

        # Unrolled Tt-step recurrence; only the h-side matmul remains per
        # step.  Gate slabs are loaded per step (static index i) so the full
        # (B, Tt, 4H) block never has to live in vregs at once.
        for i in range(Tt):
            pg_i = pg_ref[:, i, :].astype(jnp.float32)           # (B, 4H)
            gates = pg_i + jnp.dot(h, w,
                                   preferred_element_type=jnp.float32)
            i_g = jax.nn.sigmoid(gates[:, 0 * H:1 * H])
            f_g = jax.nn.sigmoid(gates[:, 1 * H:2 * H])
            g_g = jnp.tanh(gates[:, 2 * H:3 * H])
            o_g = jax.nn.sigmoid(gates[:, 3 * H:4 * H])
            c = f_g * c + i_g * g_g
            h = o_g * jnp.tanh(c)
            out_ref[:, i, :] = h.astype(out_ref.dtype)

        h_scr[...] = h
        c_scr[...] = c

    return kernel


@functools.partial(jax.jit, static_argnames=("block_t",))
def lstm_forward(x, w_ih, w_hh, b_ih, b_hh, block_t=8):
    """x: (B, T, H) batch_first.  Returns (B, T, H), matching PyTorch LSTM out."""
    B, T, H = x.shape

    # Hoisted input projection: one big MXU-friendly GEMM over all B*T rows,
    # bias folded in.  Kept in the native (B, T, 4H) layout — no transposes.
    pre_gates = jnp.einsum(
        "bth,gh->btg", x, w_ih, preferred_element_type=jnp.float32
    ) + (b_ih + b_hh).astype(jnp.float32)[None, None, :]          # (B, T, 4H)

    # Block Tt timesteps per grid step (pad T if needed; padded steps run
    # after the last real step and their outputs are sliced off, so they are
    # harmless to correctness).
    Tt = min(block_t, T)
    T_pad = pl.cdiv(T, Tt) * Tt
    if T_pad != T:
        pre_gates = jnp.pad(pre_gates, ((0, 0), (0, T_pad - T), (0, 0)))

    whh_t = jnp.transpose(w_hh)                                   # (H, 4H)
    # TODO(synk): on v6e/v7x, casting whh_t (and pre_gates) to bf16 would
    # double MXU throughput / halve resident VMEM; kept f32 for exactness.

    out = pl.pallas_call(
        _make_lstm_kernel(H, Tt),
        out_shape=jax.ShapeDtypeStruct((B, T_pad, H), x.dtype),
        grid_spec=pltpu.PrefetchScalarGridSpec(
            num_scalar_prefetch=0,
            grid=(T_pad // Tt,),
            in_specs=[
                pl.BlockSpec((B, Tt, 4 * H), lambda tb: (0, tb, 0)),  # pre_gates block
                pl.BlockSpec((H, 4 * H), lambda tb: (0, 0)),          # W_hh^T (resident)
            ],
            out_specs=pl.BlockSpec((B, Tt, H), lambda tb: (0, tb, 0)),
            scratch_shapes=[
                pltpu.VMEM((B, H), jnp.float32),   # h state (persists across grid)
                pltpu.VMEM((B, H), jnp.float32),   # c state
            ],
        ),
        compiler_params=pltpu.CompilerParams(
            dimension_semantics=("arbitrary",),    # recurrence -> sequential axis
        ),
    )(pre_gates, whh_t)

    if T_pad != T:
        out = out[:, :T, :]
    return out


def lstm_reference(x, w_ih, w_hh, b_ih, b_hh):
    """Pure-JAX reference matching torch.nn.LSTM (batch_first, 1 layer)."""
    B, T, H = x.shape

    def step(carry, x_t):
        h, c = carry
        gates = x_t @ w_ih.T + h @ w_hh.T + b_ih + b_hh
        i = jax.nn.sigmoid(gates[:, 0 * H:1 * H])
        f = jax.nn.sigmoid(gates[:, 1 * H:2 * H])
        g = jnp.tanh(gates[:, 2 * H:3 * H])
        o = jax.nn.sigmoid(gates[:, 3 * H:4 * H])
        c_new = f * c + i * g
        h_new = o * jnp.tanh(c_new)
        return (h_new, c_new), h_new

    h0 = jnp.zeros((B, H), x.dtype)
    c0 = jnp.zeros((B, H), x.dtype)
    _, out = jax.lax.scan(step, (h0, c0), jnp.transpose(x, (1, 0, 2)))
    return jnp.transpose(out, (1, 0, 2))


if __name__ == "__main__":
    B, T, H = 2, 8, 32
    key = jax.random.PRNGKey(0)
    k_x, k_wih, k_whh, k_bih, k_bhh = jax.random.split(key, 5)

    # Deterministic parameter init (PyTorch-style U(-1/sqrt(H), 1/sqrt(H))).
    bound = 1.0 / (H ** 0.5)
    x = jax.random.normal(k_x, (B, T, H), dtype=jnp.float32)
    w_ih = jax.random.uniform(k_wih, (4 * H, H), jnp.float32, -bound, bound)
    w_hh = jax.random.uniform(k_whh, (4 * H, H), jnp.float32, -bound, bound)
    b_ih = jax.random.uniform(k_bih, (4 * H,), jnp.float32, -bound, bound)
    b_hh = jax.random.uniform(k_bhh, (4 * H,), jnp.float32, -bound, bound)

    out = lstm_forward(x, w_ih, w_hh, b_ih, b_hh)
    out = jax.block_until_ready(out)

    ref = lstm_reference(x, w_ih, w_hh, b_ih, b_hh)
    assert out.shape == (B, T, H)
    assert jnp.allclose(out, ref, atol=1e-4, rtol=1e-4), "mismatch vs reference"

    print("KERNEL_OK")
</pallas_src>

<mosaic_0001>
module attributes {stable_mosaic.version = 11 : i64} {
  func.func @kernel(%arg0: i32, %arg1: memref<2x8x128xf32, #tpu.memory_space<vmem>>, %arg2: memref<32x128xf32, #tpu.memory_space<vmem>>, %arg3: memref<2x8x32xf32, #tpu.memory_space<vmem>>, %arg4: memref<2x32xf32, #tpu.memory_space<vmem>>, %arg5: memref<2x32xf32, #tpu.memory_space<vmem>>) attributes {dimension_semantics = [#tpu.dimension_semantics<arbitrary>], iteration_bounds = array<i64: 1>, scalar_prefetch = 0 : i64, scratch_operands = 2 : i64, tpu.core_type = #tpu.core_type<tc>, window_params = [{transform_indices = @transform_0, window_bounds = array<i64: 2, 8, 128>}, {pipeline_mode = #tpu.pipeline_mode<synchronous>, transform_indices = @transform_1, window_bounds = array<i64: 32, 128>}, {transform_indices = @transform_2, window_bounds = array<i64: 2, 8, 32>}]} {
    %c0_i32 = arith.constant 0 : i32
    %0 = arith.cmpi eq, %arg0, %c0_i32 : i32
    %1 = arith.extui %0 : i1 to i32
    %c0_i32_0 = arith.constant 0 : i32
    %2 = arith.cmpi ne, %1, %c0_i32_0 : i32
    scf.if %2 {
      %cst_82 = arith.constant 0.000000e+00 : f32
      %264 = vector.broadcast %cst_82 : f32 to vector<2x32xf32>
      %c0_83 = arith.constant 0 : index
      %c0_84 = arith.constant 0 : index
      %265 = vector.load %arg4[%c0_83, %c0_84] : memref<2x32xf32, #tpu.memory_space<vmem>>, vector<2x32xf32>
      tpu.vector_store %arg4[%c0_83, %c0_84], %264 {strides = array<i32>} : memref<2x32xf32, #tpu.memory_space<vmem>>, vector<2x32xf32>,
      %cst_85 = arith.constant 0.000000e+00 : f32
      %266 = vector.broadcast %cst_85 : f32 to vector<2x32xf32>
      %c0_86 = arith.constant 0 : index
      %c0_87 = arith.constant 0 : index
      %267 = vector.load %arg5[%c0_86, %c0_87] : memref<2x32xf32, #tpu.memory_space<vmem>>, vector<2x32xf32>
      tpu.vector_store %arg5[%c0_86, %c0_87], %266 {strides = array<i32>} : memref<2x32xf32, #tpu.memory_space<vmem>>, vector<2x32xf32>,
    } else {
    }
    %c0 = arith.constant 0 : index
    %c0_1 = arith.constant 0 : index
    %3 = vector.load %arg4[%c0, %c0_1] : memref<2x32xf32, #tpu.memory_space<vmem>>, vector<2x32xf32>
    %c0_2 = arith.constant 0 : index
    %c0_3 = arith.constant 0 : index
    %4 = vector.load %arg5[%c0_2, %c0_3] : memref<2x32xf32, #tpu.memory_space<vmem>>, vector<2x32xf32>
    %c0_4 = arith.constant 0 : index
    %c0_5 = arith.constant 0 : index
    %5 = vector.load %arg2[%c0_4, %c0_5] : memref<32x128xf32, #tpu.memory_space<vmem>>, vector<32x128xf32>
    %c0_6 = arith.constant 0 : index
    %c0_7 = arith.constant 0 : index
    %c0_8 = arith.constant 0 : index
    %6 = vector.load %arg1[%c0_6, %c0_7, %c0_8] : memref<2x8x128xf32, #tpu.memory_space<vmem>>, vector<2x1x128xf32>
    %7 = vector.shape_cast %6 : vector<2x1x128xf32> to vector<2x128xf32>
    %cst = arith.constant dense<0.000000e+00> : vector<2x128xf32>
    %8 = tpu.matmul %3, %5, %cst {dimension_numbers = #tpu.dot_dimension_numbers<[1], [0], [0], [1], [0, 0, 1, 1], [], []>} : vector<2x32xf32>, vector<32x128xf32>, vector<2x128xf32> -> vector<2x128xf32>
    %9 = arith.addf %7, %8 : vector<2x128xf32>
    %10 = vector.extract_strided_slice %9 {offsets = [0, 0], sizes = [2, 32], strides = [1, 1]} : vector<2x128xf32> to vector<2x32xf32>
    %11 = arith.negf %10 : vector<2x32xf32>
    %12 = math.exp %11 : vector<2x32xf32>
    %cst_9 = arith.constant 1.000000e+00 : f32
    %13 = vector.broadcast %cst_9 : f32 to vector<2x32xf32>
    %14 = arith.addf %13, %12 : vector<2x32xf32>
    %15 = arith.divf %13, %14 : vector<2x32xf32>
    %16 = vector.extract_strided_slice %9 {offsets = [0, 32], sizes = [2, 32], strides = [1, 1]} : vector<2x128xf32> to vector<2x32xf32>
    %17 = arith.negf %16 : vector<2x32xf32>
    %18 = math.exp %17 : vector<2x32xf32>
    %cst_10 = arith.constant 1.000000e+00 : f32
    %19 = vector.broadcast %cst_10 : f32 to vector<2x32xf32>
    %20 = arith.addf %19, %18 : vector<2x32xf32>
    %21 = arith.divf %19, %20 : vector<2x32xf32>
    %22 = vector.extract_strided_slice %9 {offsets = [0, 64], sizes = [2, 32], strides = [1, 1]} : vector<2x128xf32> to vector<2x32xf32>
    %23 = math.tanh %22 : vector<2x32xf32>
    %24 = vector.extract_strided_slice %9 {offsets = [0, 96], sizes = [2, 32], strides = [1, 1]} : vector<2x128xf32> to vector<2x32xf32>
    %25 = arith.negf %24 : vector<2x32xf32>
    %26 = math.exp %25 : vector<2x32xf32>
    %cst_11 = arith.constant 1.000000e+00 : f32
    %27 = vector.broadcast %cst_11 : f32 to vector<2x32xf32>
    %28 = arith.addf %27, %26 : vector<2x32xf32>
    %29 = arith.divf %27, %28 : vector<2x32xf32>
    %30 = arith.mulf %21, %4 : vector<2x32xf32>
    %31 = arith.mulf %15, %23 : vector<2x32xf32>
    %32 = arith.addf %30, %31 : vector<2x32xf32>
    %33 = math.tanh %32 : vector<2x32xf32>
    %34 = arith.mulf %29, %33 : vector<2x32xf32>
    %c0_12 = arith.constant 0 : index
    %c0_13 = arith.constant 0 : index
    %c0_14 = arith.constant 0 : index
    %35 = vector.load %arg3[%c0_12, %c0_13, %c0_14] : memref<2x8x32xf32, #tpu.memory_space<vmem>>, vector<2x1x32xf32>
    %36 = vector.shape_cast %35 : vector<2x1x32xf32> to vector<2x32xf32>
    %37 = vector.shape_cast %34 : vector<2x32xf32> to vector<2x1x32xf32>
    tpu.vector_store %arg3[%c0_12, %c0_13, %c0_14], %37 {strides = array<i32>} : memref<2x8x32xf32, #tpu.memory_space<vmem>>, vector<2x1x32xf32>,
    %c0_15 = arith.constant 0 : index
    %c1 = arith.constant 1 : index
    %c0_16 = arith.constant 0 : index
    %38 = vector.load %arg1[%c0_15, %c1, %c0_16] : memref<2x8x128xf32, #tpu.memory_space<vmem>>, vector<2x1x128xf32>
    %39 = vector.shape_cast %38 : vector<2x1x128xf32> to vector<2x128xf32>
    %cst_17 = arith.constant dense<0.000000e+00> : vector<2x128xf32>
    %40 = tpu.matmul %34, %5, %cst_17 {dimension_numbers = #tpu.dot_dimension_numbers<[1], [0], [0], [1], [0, 0, 1, 1], [], []>} : vector<2x32xf32>, vector<32x128xf32>, vector<2x128xf32> -> vector<2x128xf32>
    %41 = arith.addf %39, %40 : vector<2x128xf32>
    %42 = vector.extract_strided_slice %41 {offsets = [0, 0], sizes = [2, 32], strides = [1, 1]} : vector<2x128xf32> to vector<2x32xf32>
    %43 = arith.negf %42 : vector<2x32xf32>
    %44 = math.exp %43 : vector<2x32xf32>
    %cst_18 = arith.constant 1.000000e+00 : f32
    %45 = vector.broadcast %cst_18 : f32 to vector<2x32xf32>
    %46 = arith.addf %45, %44 : vector<2x32xf32>
    %47 = arith.divf %45, %46 : vector<2x32xf32>
    %48 = vector.extract_strided_slice %41 {offsets = [0, 32], sizes = [2, 32], strides = [1, 1]} : vector<2x128xf32> to vector<2x32xf32>
    %49 = arith.negf %48 : vector<2x32xf32>
    %50 = math.exp %49 : vector<2x32xf32>
    %cst_19 = arith.constant 1.000000e+00 : f32
    %51 = vector.broadcast %cst_19 : f32 to vector<2x32xf32>
    %52 = arith.addf %51, %50 : vector<2x32xf32>
    %53 = arith.divf %51, %52 : vector<2x32xf32>
    %54 = vector.extract_strided_slice %41 {offsets = [0, 64], sizes = [2, 32], strides = [1, 1]} : vector<2x128xf32> to vector<2x32xf32>
    %55 = math.tanh %54 : vector<2x32xf32>
    %56 = vector.extract_strided_slice %41 {offsets = [0, 96], sizes = [2, 32], strides = [1, 1]} : vector<2x128xf32> to vector<2x32xf32>
    %57 = arith.negf %56 : vector<2x32xf32>
    %58 = math.exp %57 : vector<2x32xf32>
    %cst_20 = arith.constant 1.000000e+00 : f32
    %59 = vector.broadcast %cst_20 : f32 to vector<2x32xf32>
    %60 = arith.addf %59, %58 : vector<2x32xf32>
    %61 = arith.divf %59, %60 : vector<2x32xf32>
    %62 = arith.mulf %53, %32 : vector<2x32xf32>
    %63 = arith.mulf %47, %55 : vector<2x32xf32>
    %64 = arith.addf %62, %63 : vector<2x32xf32>
    %65 = math.tanh %64 : vector<2x32xf32>
    %66 = arith.mulf %61, %65 : vector<2x32xf32>
    %c0_21 = arith.constant 0 : index
    %c1_22 = arith.constant 1 : index
    %c0_23 = arith.constant 0 : index
    %67 = vector.load %arg3[%c0_21, %c1_22, %c0_23] : memref<2x8x32xf32, #tpu.memory_space<vmem>>, vector<2x1x32xf32>
    %68 = vector.shape_cast %67 : vector<2x1x32xf32> to vector<2x32xf32>
    %69 = vector.shape_cast %66 : vector<2x32xf32> to vector<2x1x32xf32>
    tpu.vector_store %arg3[%c0_21, %c1_22, %c0_23], %69 {strides = array<i32>} : memref<2x8x32xf32, #tpu.memory_space<vmem>>, vector<2x1x32xf32>,
    %c0_24 = arith.constant 0 : index
    %c2 = arith.constant 2 : index
    %c0_25 = arith.constant 0 : index
    %70 = vector.load %arg1[%c0_24, %c2, %c0_25] : memref<2x8x128xf32, #tpu.memory_space<vmem>>, vector<2x1x128xf32>
    %71 = vector.shape_cast %70 : vector<2x1x128xf32> to vector<2x128xf32>
    %cst_26 = arith.constant dense<0.000000e+00> : vector<2x128xf32>
    %72 = tpu.matmul %66, %5, %cst_26 {dimension_numbers = #tpu.dot_dimension_numbers<[1], [0], [0], [1], [0, 0, 1, 1], [], []>} : vector<2x32xf32>, vector<32x128xf32>, vector<2x128xf32> -> vector<2x128xf32>
    %73 = arith.addf %71, %72 : vector<2x128xf32>
    %74 = vector.extract_strided_slice %73 {offsets = [0, 0], sizes = [2, 32], strides = [1, 1]} : vector<2x128xf32> to vector<2x32xf32>
    %75 = arith.negf %74 : vector<2x32xf32>
    %76 = math.exp %75 : vector<2x32xf32>
    %cst_27 = arith.constant 1.000000e+00 : f32
    %77 = vector.broadcast %cst_27 : f32 to vector<2x32xf32>
    %78 = arith.addf %77, %76 : vector<2x32xf32>
    %79 = arith.divf %77, %78 : vector<2x32xf32>
    %80 = vector.extract_strided_slice %73 {offsets = [0, 32], sizes = [2, 32], strides = [1, 1]} : vector<2x128xf32> to vector<2x32xf32>
    %81 = arith.negf %80 : vector<2x32xf32>
    %82 = math.exp %81 : vector<2x32xf32>
    %cst_28 = arith.constant 1.000000e+00 : f32
    %83 = vector.broadcast %cst_28 : f32 to vector<2x32xf32>
    %84 = arith.addf %83, %82 : vector<2x32xf32>
    %85 = arith.divf %83, %84 : vector<2x32xf32>
    %86 = vector.extract_strided_slice %73 {offsets = [0, 64], sizes = [2, 32], strides = [1, 1]} : vector<2x128xf32> to vector<2x32xf32>
    %87 = math.tanh %86 : vector<2x32xf32>
    %88 = vector.extract_strided_slice %73 {offsets = [0, 96], sizes = [2, 32], strides = [1, 1]} : vector<2x128xf32> to vector<2x32xf32>
    %89 = arith.negf %88 : vector<2x32xf32>
    %90 = math.exp %89 : vector<2x32xf32>
    %cst_29 = arith.constant 1.000000e+00 : f32
    %91 = vector.broadcast %cst_29 : f32 to vector<2x32xf32>
    %92 = arith.addf %91, %90 : vector<2x32xf32>
    %93 = arith.divf %91, %92 : vector<2x32xf32>
    %94 = arith.mulf %85, %64 : vector<2x32xf32>
    %95 = arith.mulf %79, %87 : vector<2x32xf32>
    %96 = arith.addf %94, %95 : vector<2x32xf32>
    %97 = math.tanh %96 : vector<2x32xf32>
    %98 = arith.mulf %93, %97 : vector<2x32xf32>
    %c0_30 = arith.constant 0 : index
    %c2_31 = arith.constant 2 : index
    %c0_32 = arith.constant 0 : index
    %99 = vector.load %arg3[%c0_30, %c2_31, %c0_32] : memref<2x8x32xf32, #tpu.memory_space<vmem>>, vector<2x1x32xf32>
    %100 = vector.shape_cast %99 : vector<2x1x32xf32> to vector<2x32xf32>
    %101 = vector.shape_cast %98 : vector<2x32xf32> to vector<2x1x32xf32>
    tpu.vector_store %arg3[%c0_30, %c2_31, %c0_32], %101 {strides = array<i32>} : memref<2x8x32xf32, #tpu.memory_space<vmem>>, vector<2x1x32xf32>,
    %c0_33 = arith.constant 0 : index
    %c3 = arith.constant 3 : index
    %c0_34 = arith.constant 0 : index
    %102 = vector.load %arg1[%c0_33, %c3, %c0_34] : memref<2x8x128xf32, #tpu.memory_space<vmem>>, vector<2x1x128xf32>
    %103 = vector.shape_cast %102 : vector<2x1x128xf32> to vector<2x128xf32>
    %cst_35 = arith.constant dense<0.000000e+00> : vector<2x128xf32>
    %104 = tpu.matmul %98, %5, %cst_35 {dimension_numbers = #tpu.dot_dimension_numbers<[1], [0], [0], [1], [0, 0, 1, 1], [], []>} : vector<2x32xf32>, vector<32x128xf32>, vector<2x128xf32> -> vector<2x128xf32>
    %105 = arith.addf %103, %104 : vector<2x128xf32>
    %106 = vector.extract_strided_slice %105 {offsets = [0, 0], sizes = [2, 32], strides = [1, 1]} : vector<2x128xf32> to vector<2x32xf32>
    %107 = arith.negf %106 : vector<2x32xf32>
    %108 = math.exp %107 : vector<2x32xf32>
    %cst_36 = arith.constant 1.000000e+00 : f32
    %109 = vector.broadcast %cst_36 : f32 to vector<2x32xf32>
    %110 = arith.addf %109, %108 : vector<2x32xf32>
    %111 = arith.divf %109, %110 : vector<2x32xf32>
    %112 = vector.extract_strided_slice %105 {offsets = [0, 32], sizes = [2, 32], strides = [1, 1]} : vector<2x128xf32> to vector<2x32xf32>
    %113 = arith.negf %112 : vector<2x32xf32>
    %114 = math.exp %113 : vector<2x32xf32>
    %cst_37 = arith.constant 1.000000e+00 : f32
    %115 = vector.broadcast %cst_37 : f32 to vector<2x32xf32>
    %116 = arith.addf %115, %114 : vector<2x32xf32>
    %117 = arith.divf %115, %116 : vector<2x32xf32>
    %118 = vector.extract_strided_slice %105 {offsets = [0, 64], sizes = [2, 32], strides = [1, 1]} : vector<2x128xf32> to vector<2x32xf32>
    %119 = math.tanh %118 : vector<2x32xf32>
    %120 = vector.extract_strided_slice %105 {offsets = [0, 96], sizes = [2, 32], strides = [1, 1]} : vector<2x128xf32> to vector<2x32xf32>
    %121 = arith.negf %120 : vector<2x32xf32>
    %122 = math.exp %121 : vector<2x32xf32>
    %cst_38 = arith.constant 1.000000e+00 : f32
    %123 = vector.broadcast %cst_38 : f32 to vector<2x32xf32>
    %124 = arith.addf %123, %122 : vector<2x32xf32>
    %125 = arith.divf %123, %124 : vector<2x32xf32>
    %126 = arith.mulf %117, %96 : vector<2x32xf32>
    %127 = arith.mulf %111, %119 : vector<2x32xf32>
    %128 = arith.addf %126, %127 : vector<2x32xf32>
    %129 = math.tanh %128 : vector<2x32xf32>
    %130 = arith.mulf %125, %129 : vector<2x32xf32>
    %c0_39 = arith.constant 0 : index
    %c3_40 = arith.constant 3 : index
    %c0_41 = arith.constant 0 : index
    %131 = vector.load %arg3[%c0_39, %c3_40, %c0_41] : memref<2x8x32xf32, #tpu.memory_space<vmem>>, vector<2x1x32xf32>
    %132 = vector.shape_cast %131 : vector<2x1x32xf32> to vector<2x32xf32>
    %133 = vector.shape_cast %130 : vector<2x32xf32> to vector<2x1x32xf32>
    tpu.vector_store %arg3[%c0_39, %c3_40, %c0_41], %133 {strides = array<i32>} : memref<2x8x32xf32, #tpu.memory_space<vmem>>, vector<2x1x32xf32>,
    %c0_42 = arith.constant 0 : index
    %c4 = arith.constant 4 : index
    %c0_43 = arith.constant 0 : index
    %134 = vector.load %arg1[%c0_42, %c4, %c0_43] : memref<2x8x128xf32, #tpu.memory_space<vmem>>, vector<2x1x128xf32>
    %135 = vector.shape_cast %134 : vector<2x1x128xf32> to vector<2x128xf32>
    %cst_44 = arith.constant dense<0.000000e+00> : vector<2x128xf32>
    %136 = tpu.matmul %130, %5, %cst_44 {dimension_numbers = #tpu.dot_dimension_numbers<[1], [0], [0], [1], [0, 0, 1, 1], [], []>} : vector<2x32xf32>, vector<32x128xf32>, vector<2x128xf32> -> vector<2x128xf32>
    %137 = arith.addf %135, %136 : vector<2x128xf32>
    %138 = vector.extract_strided_slice %137 {offsets = [0, 0], sizes = [2, 32], strides = [1, 1]} : vector<2x128xf32> to vector<2x32xf32>
    %139 = arith.negf %138 : vector<2x32xf32>
    %140 = math.exp %139 : vector<2x32xf32>
    %cst_45 = arith.constant 1.000000e+00 : f32
    %141 = vector.broadcast %cst_45 : f32 to vector<2x32xf32>
    %142 = arith.addf %141, %140 : vector<2x32xf32>
    %143 = arith.divf %141, %142 : vector<2x32xf32>
    %144 = vector.extract_strided_slice %137 {offsets = [0, 32], sizes = [2, 32], strides = [1, 1]} : vector<2x128xf32> to vector<2x32xf32>
    %145 = arith.negf %144 : vector<2x32xf32>
    %146 = math.exp %145 : vector<2x32xf32>
    %cst_46 = arith.constant 1.000000e+00 : f32
    %147 = vector.broadcast %cst_46 : f32 to vector<2x32xf32>
    %148 = arith.addf %147, %146 : vector<2x32xf32>
    %149 = arith.divf %147, %148 : vector<2x32xf32>
    %150 = vector.extract_strided_slice %137 {offsets = [0, 64], sizes = [2, 32], strides = [1, 1]} : vector<2x128xf32> to vector<2x32xf32>
    %151 = math.tanh %150 : vector<2x32xf32>
    %152 = vector.extract_strided_slice %137 {offsets = [0, 96], sizes = [2, 32], strides = [1, 1]} : vector<2x128xf32> to vector<2x32xf32>
    %153 = arith.negf %152 : vector<2x32xf32>
    %154 = math.exp %153 : vector<2x32xf32>
    %cst_47 = arith.constant 1.000000e+00 : f32
    %155 = vector.broadcast %cst_47 : f32 to vector<2x32xf32>
    %156 = arith.addf %155, %154 : vector<2x32xf32>
    %157 = arith.divf %155, %156 : vector<2x32xf32>
    %158 = arith.mulf %149, %128 : vector<2x32xf32>
    %159 = arith.mulf %143, %151 : vector<2x32xf32>
    %160 = arith.addf %158, %159 : vector<2x32xf32>
    %161 = math.tanh %160 : vector<2x32xf32>
    %162 = arith.mulf %157, %161 : vector<2x32xf32>
    %c0_48 = arith.constant 0 : index
    %c4_49 = arith.constant 4 : index
    %c0_50 = arith.constant 0 : index
    %163 = vector.load %arg3[%c0_48, %c4_49, %c0_50] : memref<2x8x32xf32, #tpu.memory_space<vmem>>, vector<2x1x32xf32>
    %164 = vector.shape_cast %163 : vector<2x1x32xf32> to vector<2x32xf32>
    %165 = vector.shape_cast %162 : vector<2x32xf32> to vector<2x1x32xf32>
    tpu.vector_store %arg3[%c0_48, %c4_49, %c0_50], %165 {strides = array<i32>} : memref<2x8x32xf32, #tpu.memory_space<vmem>>, vector<2x1x32xf32>,
    %c0_51 = arith.constant 0 : index
    %c5 = arith.constant 5 : index
    %c0_52 = arith.constant 0 : index
    %166 = vector.load %arg1[%c0_51, %c5, %c0_52] : memref<2x8x128xf32, #tpu.memory_space<vmem>>, vector<2x1x128xf32>
    %167 = vector.shape_cast %166 : vector<2x1x128xf32> to vector<2x128xf32>
    %cst_53 = arith.constant dense<0.000000e+00> : vector<2x128xf32>
    %168 = tpu.matmul %162, %5, %cst_53 {dimension_numbers = #tpu.dot_dimension_numbers<[1], [0], [0], [1], [0, 0, 1, 1], [], []>} : vector<2x32xf32>, vector<32x128xf32>, vector<2x128xf32> -> vector<2x128xf32>
    %169 = arith.addf %167, %168 : vector<2x128xf32>
    %170 = vector.extract_strided_slice %169 {offsets = [0, 0], sizes = [2, 32], strides = [1, 1]} : vector<2x128xf32> to vector<2x32xf32>
    %171 = arith.negf %170 : vector<2x32xf32>
    %172 = math.exp %171 : vector<2x32xf32>
    %cst_54 = arith.constant 1.000000e+00 : f32
    %173 = vector.broadcast %cst_54 : f32 to vector<2x32xf32>
    %174 = arith.addf %173, %172 : vector<2x32xf32>
    %175 = arith.divf %173, %174 : vector<2x32xf32>
    %176 = vector.extract_strided_slice %169 {offsets = [0, 32], sizes = [2, 32], strides = [1, 1]} : vector<2x128xf32> to vector<2x32xf32>
    %177 = arith.negf %176 : vector<2x32xf32>
    %178 = math.exp %177 : vector<2x32xf32>
    %cst_55 = arith.constant 1.000000e+00 : f32
    %179 = vector.broadcast %cst_55 : f32 to vector<2x32xf32>
    %180 = arith.addf %179, %178 : vector<2x32xf32>
    %181 = arith.divf %179, %180 : vector<2x32xf32>
    %182 = vector.extract_strided_slice %169 {offsets = [0, 64], sizes = [2, 32], strides = [1, 1]} : vector<2x128xf32> to vector<2x32xf32>
    %183 = math.tanh %182 : vector<2x32xf32>
    %184 = vector.extract_strided_slice %169 {offsets = [0, 96], sizes = [2, 32], strides = [1, 1]} : vector<2x128xf32> to vector<2x32xf32>
    %185 = arith.negf %184 : vector<2x32xf32>
    %186 = math.exp %185 : vector<2x32xf32>
    %cst_56 = arith.constant 1.000000e+00 : f32
    %187 = vector.broadcast %cst_56 : f32 to vector<2x32xf32>
    %188 = arith.addf %187, %186 : vector<2x32xf32>
    %189 = arith.divf %187, %188 : vector<2x32xf32>
    %190 = arith.mulf %181, %160 : vector<2x32xf32>
    %191 = arith.mulf %175, %183 : vector<2x32xf32>
    %192 = arith.addf %190, %191 : vector<2x32xf32>
    %193 = math.tanh %192 : vector<2x32xf32>
    %194 = arith.mulf %189, %193 : vector<2x32xf32>
    %c0_57 = arith.constant 0 : index
    %c5_58 = arith.constant 5 : index
    %c0_59 = arith.constant 0 : index
    %195 = vector.load %arg3[%c0_57, %c5_58, %c0_59] : memref<2x8x32xf32, #tpu.memory_space<vmem>>, vector<2x1x32xf32>
    %196 = vector.shape_cast %195 : vector<2x1x32xf32> to vector<2x32xf32>
    %197 = vector.shape_cast %194 : vector<2x32xf32> to vector<2x1x32xf32>
    tpu.vector_store %arg3[%c0_57, %c5_58, %c0_59], %197 {strides = array<i32>} : memref<2x8x32xf32, #tpu.memory_space<vmem>>, vector<2x1x32xf32>,
    %c0_60 = arith.constant 0 : index
    %c6 = arith.constant 6 : index
    %c0_61 = arith.constant 0 : index
    %198 = vector.load %arg1[%c0_60, %c6, %c0_61] : memref<2x8x128xf32, #tpu.memory_space<vmem>>, vector<2x1x128xf32>
    %199 = vector.shape_cast %198 : vector<2x1x128xf32> to vector<2x128xf32>
    %cst_62 = arith.constant dense<0.000000e+00> : vector<2x128xf32>
    %200 = tpu.matmul %194, %5, %cst_62 {dimension_numbers = #tpu.dot_dimension_numbers<[1], [0], [0], [1], [0, 0, 1, 1], [], []>} : vector<2x32xf32>, vector<32x128xf32>, vector<2x128xf32> -> vector<2x128xf32>
    %201 = arith.addf %199, %200 : vector<2x128xf32>
    %202 = vector.extract_strided_slice %201 {offsets = [0, 0], sizes = [2, 32], strides = [1, 1]} : vector<2x128xf32> to vector<2x32xf32>
    %203 = arith.negf %202 : vector<2x32xf32>
    %204 = math.exp %203 : vector<2x32xf32>
    %cst_63 = arith.constant 1.000000e+00 : f32
    %205 = vector.broadcast %cst_63 : f32 to vector<2x32xf32>
    %206 = arith.addf %205, %204 : vector<2x32xf32>
    %207 = arith.divf %205, %206 : vector<2x32xf32>
    %208 = vector.extract_strided_slice %201 {offsets = [0, 32], sizes = [2, 32], strides = [1, 1]} : vector<2x128xf32> to vector<2x32xf32>
    %209 = arith.negf %208 : vector<2x32xf32>
    %210 = math.exp %209 : vector<2x32xf32>
    %cst_64 = arith.constant 1.000000e+00 : f32
    %211 = vector.broadcast %cst_64 : f32 to vector<2x32xf32>
    %212 = arith.addf %211, %210 : vector<2x32xf32>
    %213 = arith.divf %211, %212 : vector<2x32xf32>
    %214 = vector.extract_strided_slice %201 {offsets = [0, 64], sizes = [2, 32], strides = [1, 1]} : vector<2x128xf32> to vector<2x32xf32>
    %215 = math.tanh %214 : vector<2x32xf32>
    %216 = vector.extract_strided_slice %201 {offsets = [0, 96], sizes = [2, 32], strides = [1, 1]} : vector<2x128xf32> to vector<2x32xf32>
    %217 = arith.negf %216 : vector<2x32xf32>
    %218 = math.exp %217 : vector<2x32xf32>
    %cst_65 = arith.constant 1.000000e+00 : f32
    %219 = vector.broadcast %cst_65 : f32 to vector<2x32xf32>
    %220 = arith.addf %219, %218 : vector<2x32xf32>
    %221 = arith.divf %219, %220 : vector<2x32xf32>
    %222 = arith.mulf %213, %192 : vector<2x32xf32>
    %223 = arith.mulf %207, %215 : vector<2x32xf32>
    %224 = arith.addf %222, %223 : vector<2x32xf32>
    %225 = math.tanh %224 : vector<2x32xf32>
    %226 = arith.mulf %221, %225 : vector<2x32xf32>
    %c0_66 = arith.constant 0 : index
    %c6_67 = arith.constant 6 : index
    %c0_68 = arith.constant 0 : index
    %227 = vector.load %arg3[%c0_66, %c6_67, %c0_68] : memref<2x8x32xf32, #tpu.memory_space<vmem>>, vector<2x1x32xf32>
    %228 = vector.shape_cast %227 : vector<2x1x32xf32> to vector<2x32xf32>
    %229 = vector.shape_cast %226 : vector<2x32xf32> to vector<2x1x32xf32>
    tpu.vector_store %arg3[%c0_66, %c6_67, %c0_68], %229 {strides = array<i32>} : memref<2x8x32xf32, #tpu.memory_space<vmem>>, vector<2x1x32xf32>,
    %c0_69 = arith.constant 0 : index
    %c7 = arith.constant 7 : index
    %c0_70 = arith.constant 0 : index
    %230 = vector.load %arg1[%c0_69, %c7, %c0_70] : memref<2x8x128xf32, #tpu.memory_space<vmem>>, vector<2x1x128xf32>
    %231 = vector.shape_cast %230 : vector<2x1x128xf32> to vector<2x128xf32>
    %cst_71 = arith.constant dense<0.000000e+00> : vector<2x128xf32>
    %232 = tpu.matmul %226, %5, %cst_71 {dimension_numbers = #tpu.dot_dimension_numbers<[1], [0], [0], [1], [0, 0, 1, 1], [], []>} : vector<2x32xf32>, vector<32x128xf32>, vector<2x128xf32> -> vector<2x128xf32>
    %233 = arith.addf %231, %232 : vector<2x128xf32>
    %234 = vector.extract_strided_slice %233 {offsets = [0, 0], sizes = [2, 32], strides = [1, 1]} : vector<2x128xf32> to vector<2x32xf32>
    %235 = arith.negf %234 : vector<2x32xf32>
    %236 = math.exp %235 : vector<2x32xf32>
    %cst_72 = arith.constant 1.000000e+00 : f32
    %237 = vector.broadcast %cst_72 : f32 to vector<2x32xf32>
    %238 = arith.addf %237, %236 : vector<2x32xf32>
    %239 = arith.divf %237, %238 : vector<2x32xf32>
    %240 = vector.extract_strided_slice %233 {offsets = [0, 32], sizes = [2, 32], strides = [1, 1]} : vector<2x128xf32> to vector<2x32xf32>
    %241 = arith.negf %240 : vector<2x32xf32>
    %242 = math.exp %241 : vector<2x32xf32>
    %cst_73 = arith.constant 1.000000e+00 : f32
    %243 = vector.broadcast %cst_73 : f32 to vector<2x32xf32>
    %244 = arith.addf %243, %242 : vector<2x32xf32>
    %245 = arith.divf %243, %244 : vector<2x32xf32>
    %246 = vector.extract_strided_slice %233 {offsets = [0, 64], sizes = [2, 32], strides = [1, 1]} : vector<2x128xf32> to vector<2x32xf32>
    %247 = math.tanh %246 : vector<2x32xf32>
    %248 = vector.extract_strided_slice %233 {offsets = [0, 96], sizes = [2, 32], strides = [1, 1]} : vector<2x128xf32> to vector<2x32xf32>
    %249 = arith.negf %248 : vector<2x32xf32>
    %250 = math.exp %249 : vector<2x32xf32>
    %cst_74 = arith.constant 1.000000e+00 : f32
    %251 = vector.broadcast %cst_74 : f32 to vector<2x32xf32>
    %252 = arith.addf %251, %250 : vector<2x32xf32>
    %253 = arith.divf %251, %252 : vector<2x32xf32>
    %254 = arith.mulf %245, %224 : vector<2x32xf32>
    %255 = arith.mulf %239, %247 : vector<2x32xf32>
    %256 = arith.addf %254, %255 : vector<2x32xf32>
    %257 = math.tanh %256 : vector<2x32xf32>
    %258 = arith.mulf %253, %257 : vector<2x32xf32>
    %c0_75 = arith.constant 0 : index
    %c7_76 = arith.constant 7 : index
    %c0_77 = arith.constant 0 : index
    %259 = vector.load %arg3[%c0_75, %c7_76, %c0_77] : memref<2x8x32xf32, #tpu.memory_space<vmem>>, vector<2x1x32xf32>
    %260 = vector.shape_cast %259 : vector<2x1x32xf32> to vector<2x32xf32>
    %261 = vector.shape_cast %258 : vector<2x32xf32> to vector<2x1x32xf32>
    tpu.vector_store %arg3[%c0_75, %c7_76, %c0_77], %261 {strides = array<i32>} : memref<2x8x32xf32, #tpu.memory_space<vmem>>, vector<2x1x32xf32>,
    %c0_78 = arith.constant 0 : index
    %c0_79 = arith.constant 0 : index
    %262 = vector.load %arg4[%c0_78, %c0_79] : memref<2x32xf32, #tpu.memory_space<vmem>>, vector<2x32xf32>
    tpu.vector_store %arg4[%c0_78, %c0_79], %258 {strides = array<i32>} : memref<2x32xf32, #tpu.memory_space<vmem>>, vector<2x32xf32>,
    %c0_80 = arith.constant 0 : index
    %c0_81 = arith.constant 0 : index
    %263 = vector.load %arg5[%c0_80, %c0_81] : memref<2x32xf32, #tpu.memory_space<vmem>>, vector<2x32xf32>
    tpu.vector_store %arg5[%c0_80, %c0_81], %256 {strides = array<i32>} : memref<2x32xf32, #tpu.memory_space<vmem>>, vector<2x32xf32>,
    return
  }
  func.func @transform_0(%arg0: i32) -> (i32, i32, i32) {
    %c0_i32 = arith.constant 0 : i32
    %c0_i32_0 = arith.constant 0 : i32
    %c0_i32_1 = arith.constant 0 : i32
    return %c0_i32, %arg0, %c0_i32_0 : i32, i32, i32
  }
  func.func @transform_1(%arg0: i32) -> (i32, i32) {
    %c0_i32 = arith.constant 0 : i32
    %c0_i32_0 = arith.constant 0 : i32
    %c0_i32_1 = arith.constant 0 : i32
    return %c0_i32, %c0_i32_0 : i32, i32
  }
  func.func @transform_2(%arg0: i32) -> (i32, i32, i32) {
    %c0_i32 = arith.constant 0 : i32
    %c0_i32_0 = arith.constant 0 : i32
    %c0_i32_1 = arith.constant 0 : i32
    return %c0_i32, %arg0, %c0_i32_0 : i32, i32, i32
  }
}

</mosaic_0001>

<llo_original>
// kernel: lstm_forward.1
$region0: #{lstm_forward.1}
  #allocation0 [shape = 'u32[]', space=smem, size = 0x4, offset = 0x4, fixed_abs, tag = 'smem constant byte address 0x4 - core index']
  #allocation1 [shape = 'u32[144,128]{1,0:T(1,128)}', space=vmem, size = 0x12000, scoped, tag = 'internal scratch']
  #allocation2 [shape = 'f32[2,32]{1,0:T(2,128)}', space=vmem, size = 0x400, scoped, tag = 'scratch operand']
  #allocation3 [shape = 'f32[2,32]{1,0:T(2,128)}', space=vmem, size = 0x400, scoped, tag = 'scratch operand']
  %s0 = inlined_call_operand.vmem [shape: f32[2,8,128], index: 0, kind: input, shape index: {}]
  %s1 = inlined_call_operand.vmem [shape: f32[32,128], index: 1, kind: input, shape index: {}]
  %s2 = inlined_call_operand.hbm [shape: f32[2,8,32], index: 2, kind: output, shape index: {}]
  %s3 = sld [smem:[#allocation0]]
  $region22: #{lstm_forward.1} parent=0
    _
  %s5 = ssub.s32 1, %s3
  %s6 = scalar_select 0, %s5, %s3
  $region1: #{lstm_forward.1} parent=0
    #allocation4 [shape = 'u8[8192]{0}', space=vmem, size = 0x2000, scoped, tag = 'output window, operand 0, single buffered']
    #allocation5 [shape = 's32[1]{0}', space=sflag, size = 0x4, scoped, tag = 'scoped memory for lstm_forward.1']
    %7 = vsyncpa [#allocation5], 0
    // Predicated region
    $region2: #{lstm_forward.1} parent=1 // pred_check
      _
    $region3: #{lstm_forward.1} parent=1 // pred_check_branch
      %9 = sbr.rel (0) target = $region5
    $region4: #{lstm_forward.1} parent=1 // pred_region
      _
    $region5: #{lstm_forward.1} parent=1 // pred_fallthru
      _
    // Predicated region
    $region6: #{lstm_forward.1} parent=1 // pred_check
      _
    $region7: #{lstm_forward.1} parent=1 // pred_check_branch
      %11 = sbr.rel (0) target = $region9
    $region8: #{lstm_forward.1} parent=1 // pred_region
      _
    $region9: #{lstm_forward.1} parent=1 // pred_fallthru
      _
    %p12 = scmp.eq.s32.totalorder 0, 0
    // Predicated region
    $region10: #{lstm_forward.1} parent=1 // pred_check
      %p13 = pneg %p12
    $region11: #{lstm_forward.1} parent=1 // pred_check_branch
      %15 = sbr.rel (%p13) target = $region13
    $region12: #{lstm_forward.1} parent=1 // pred_region
      %vm16 = vcmask 254976
      %17 = vst.msk [vmem:[#allocation2] sm:$0x3] %vm16, 0.0
      %18 = vst.msk [vmem:[#allocation3] sm:$0x3] %vm16, 0.0
    $region13: #{lstm_forward.1} parent=1 // pred_fallthru
      _
    %v19 = vld [vmem:[#allocation2] sm:$0x3]
    %v20 = vld [vmem:[#allocation3] sm:$0x3]
    %v21 = vld [vmem:[%s1] sm:$0xff]
    %v22 = vld [vmem:[%s1 + $0x8] sm:$0xff]
    %v23 = vld [vmem:[%s1 + $0x10] sm:$0xff]
    %v24 = vld [vmem:[%s1 + $0x18] sm:$0xff]
    %v25 = vld [vmem:[%s0] sm:$0x1]
    %v26 = vld [vmem:[%s0 + $0x8] sm:$0x1]
    %vm27 = vcmask 261120
    %v29 = vsel %vm27, %v19, 0
    %31 = vmatprep.subr.mxu0 0.0
    %32 = vmatpush1.msra.mxu0 %v21
    %33 = vmatprep.subr.mxu0 0.0
    %34 = vmatpush1.msra.mxu0 %v22
    %35 = vmatprep.subr.mxu0 0.0
    %36 = vmatpush1.msra.mxu0 %v23
    %37 = vmatprep.subr.mxu0 0.0
    %38 = vmatpush1.msra.mxu0 %v24
    %39 = vmatprep.subr.mxu0 0.0
    %40 = vmatpush1.msra.mxu0 0.0
    %41 = vmatprep.subr.mxu0 0.0
    %42 = vmatpush1.msra.mxu0 0.0
    %43 = vmatprep.subr.mxu0 0.0
    %44 = vmatpush1.msra.mxu0 0.0
    %45 = vmatprep.subr.mxu0 0.0
    %46 = vmatpush1.msra.mxu0 0.0
    %47 = vmatprep.subr.mxu0 0.0
    %48 = vmatpush1.msra.mxu0 0.0
    %49 = vmatprep.subr.mxu0 0.0
    %50 = vmatpush1.msra.mxu0 0.0
    %51 = vmatprep.subr.mxu0 0.0
    %52 = vmatpush1.msra.mxu0 0.0
    %53 = vmatprep.subr.mxu0 0.0
    %54 = vmatpush1.msra.mxu0 0.0
    %55 = vmatprep.subr.mxu0 0.0
    %56 = vmatpush1.msra.mxu0 0.0
    %57 = vmatprep.subr.mxu0 0.0
    %58 = vmatpush1.msra.mxu0 0.0
    %59 = vmatprep.subr.mxu0 0.0
    %60 = vmatpush1.msra.mxu0 0.0
    %61 = vmatprep.subr.mxu0 0.0
    %62 = vmatpush1.msra.mxu0 0.0
    %63 = vmatprep.subr.mxu0 0.0
    %64 = vmatpush1.msra.mxu0 0.0
    %65 = vmatprep.subr.mxu0 0.0
    %66 = vmatpush1.msra.mxu0 0.0
    %67 = vmatprep.subr.mxu0 0.0
    %68 = vmatpush1.msra.mxu0 0.0
    %69 = vmatprep.subr.mxu0 0.0
    %70 = vmatpush1.msra.mxu0 0.0
    %71 = vmatprep.subr.mxu0 0.0
    %72 = vmatpush1.msra.mxu0 0.0
    %73 = vmatprep.subr.mxu0 0.0
    %74 = vmatpush1.msra.mxu0 0.0
    %75 = vmatprep.subr.mxu0 0.0
    %76 = vmatpush1.msra.mxu0 0.0
    %77 = vmatprep.subr.mxu0 0.0
    %78 = vmatpush1.msra.mxu0 0.0
    %79 = vmatprep.subr.mxu0 0.0
    %80 = vmatpush1.msra.mxu0 0.0
    %81 = vmatprep.subr.mxu0 0.0
    %82 = vmatpush1.msra.mxu0 0.0
    %83 = vmatprep.subr.mxu0 0.0
    %84 = vmatpush1.msra.mxu0 0.0
    %85 = vmatprep.subr.mxu0 0.0
    %86 = vmatpush1.msra.mxu0 0.0
    %87 = vmatprep.subr.mxu0 0.0
    %88 = vmatpush1.msra.mxu0 0.0
    %89 = vmatprep.subr.mxu0 0.0
    %90 = vmatpush1.msra.mxu0 0.0
    %91 = vmatprep.subr.mxu0 0.0
    %92 = vmatpush1.msra.mxu0 0.0
    %93 = vmatprep.subr.mxu0 0.0
    %94 = vmatpush1.msra.mxu0 0.0
    %95 = vmatprep.mubr.f32.mxu0 0.0
    %96 = vmatmul.mubr.f32.gmra.mrb[0].mxu0 %v29
    %v97 = vpop.f32.mrb[0].mxu0
    %v98 = vadd.f32 0.0, %v97
    %v99 = vpop.f32.mrb[0].mxu0
    %100 = vdwg.mxu0
    %v102 = vrot.slane %v98, 1
    %v105 = vadd.f32 %v25, %v98
    %v106 = vadd.f32 %v26, %v102
    %v107 = vxor.u32 %v105, 2147483648
    %v108 = vxor.u32 %v106, 2147483648
    %v109 = vmul.f32 %v107, 1.442695
    %v110 = vpow.pop %v109
    %v111 = vmul.f32 %v108, 1.442695
    %v112 = vpow.pop %v111
    %v113 = vadd.f32 %v110, 1.0
    %v114 = vadd.f32 %v112, 1.0
    %v115 = vrcp.pop %v113
    %v116 = vmul.f32 1.0, %v115
    %v117 = vrcp.pop %v114
    %v118 = vmul.f32 1.0, %v117
    %v119 = vtanh.pop %v105
    %v120 = vtanh.pop %v106
    %v122 = vrot.slane %v20, 1
    %123 = vrot.lane.b32.xlu0 %v20, 32
    %v124 = vpop.permute.xlu0 %123
    %125 = vrot.lane.b32.xlu0 %v122, 32
    %v126 = vpop.permute.xlu0 %125
    %v129 = vmul.f32 %v116, %v124
    %v130 = vmul.f32 %v118, %v126
    %133 = vrot.lane.b32.xlu0 %v119, 64
    %v134 = vpop.permute.xlu0 %133
    %135 = vrot.lane.b32.xlu0 %v120, 64
    %v136 = vpop.permute.xlu0 %135
    %v139 = vmul.f32 %v116, %v134
    %v140 = vmul.f32 %v118, %v136
    %143 = vrot.lane.b32.xlu0 %v139, 32
    %v144 = vpop.permute.xlu0 %143
    %145 = vrot.lane.b32.xlu0 %v140, 32
    %v146 = vpop.permute.xlu0 %145
    %v149 = vadd.f32 %v129, %v144
    %v150 = vadd.f32 %v130, %v146
    %v151 = vtanh.pop %v149
    %v152 = vtanh.pop %v150
    %155 = vrot.lane.b32.xlu0 %v151, 64
    %v156 = vpop.permute.xlu0 %155
    %157 = vrot.lane.b32.xlu0 %v152, 64
    %v158 = vpop.permute.xlu0 %157
    %v161 = vmul.f32 %v116, %v156
    %v162 = vmul.f32 %v118, %v158
    %165 = vrot.lane.b32.xlu0 %v161, 32
    %v166 = vpop.permute.xlu0 %165
    %167 = vrot.lane.b32.xlu0 %v162, 32
    %v168 = vpop.permute.xlu0 %167
    %vm171 = vcmask 253952
    %172 = vst.msk [vmem:[#allocation4] sm:$0x1] %vm171, %v166
    %173 = vst.msk [vmem:[#allocation4 + $0x8] sm:$0x1] %vm171, %v168
    %v174 = vld [vmem:[%s0 + $0x1] sm:$0x1]
    %v175 = vld [vmem:[%s0 + $0x9] sm:$0x1]
    %v176 = vrot.slane %v162, 7
    %vm177 = vcmask 1041409
    %v178 = vsel %vm177, %v176, %v161
    %179 = vrot.lane.b32.xlu0 %v178, 32
    %v180 = vpop.permute.xlu0 %179
    %v181 = vsel %vm27, %v180, 0
    %183 = vmatprep.subr.mxu0 0.0
    %184 = vmatpush1.msra.mxu0 %v21
    %185 = vmatprep.subr.mxu0 0.0
    %186 = vmatpush1.msra.mxu0 %v22
    %187 = vmatprep.subr.mxu0 0.0
    %188 = vmatpush1.msra.mxu0 %v23
    %189 = vmatprep.subr.mxu0 0.0
    %190 = vmatpush1.msra.mxu0 %v24
    %191 = vmatprep.subr.mxu0 0.0
    %192 = vmatpush1.msra.mxu0 0.0
    %193 = vmatprep.subr.mxu0 0.0
    %194 = vmatpush1.msra.mxu0 0.0
    %195 = vmatprep.subr.mxu0 0.0
    %196 = vmatpush1.msra.mxu0 0.0
    %197 = vmatprep.subr.mxu0 0.0
    %198 = vmatpush1.msra.mxu0 0.0
    %199 = vmatprep.subr.mxu0 0.0
    %200 = vmatpush1.msra.mxu0 0.0
    %201 = vmatprep.subr.mxu0 0.0
    %202 = vmatpush1.msra.mxu0 0.0
    %203 = vmatprep.subr.mxu0 0.0
    %204 = vmatpush1.msra.mxu0 0.0
    %205 = vmatprep.subr.mxu0 0.0
    %206 = vmatpush1.msra.mxu0 0.0
    %207 = vmatprep.subr.mxu0 0.0
    %208 = vmatpush1.msra.mxu0 0.0
    %209 = vmatprep.subr.mxu0 0.0
    %210 = vmatpush1.msra.mxu0 0.0
    %211 = vmatprep.subr.mxu0 0.0
    %212 = vmatpush1.msra.mxu0 0.0
    %213 = vmatprep.subr.mxu0 0.0
    %214 = vmatpush1.msra.mxu0 0.0
    %215 = vmatprep.subr.mxu0 0.0
    %216 = vmatpush1.msra.mxu0 0.0
    %217 = vmatprep.subr.mxu0 0.0
    %218 = vmatpush1.msra.mxu0 0.0
    %219 = vmatprep.subr.mxu0 0.0
    %220 = vmatpush1.msra.mxu0 0.0
    %221 = vmatprep.subr.mxu0 0.0
    %222 = vmatpush1.msra.mxu0 0.0
    %223 = vmatprep.subr.mxu0 0.0
    %224 = vmatpush1.msra.mxu0 0.0
    %225 = vmatprep.subr.mxu0 0.0
    %226 = vmatpush1.msra.mxu0 0.0
    %227 = vmatprep.subr.mxu0 0.0
    %228 = vmatpush1.msra.mxu0 0.0
    %229 = vmatprep.subr.mxu0 0.0
    %230 = vmatpush1.msra.mxu0 0.0
    %231 = vmatprep.subr.mxu0 0.0
    %232 = vmatpush1.msra.mxu0 0.0
    %233 = vmatprep.subr.mxu0 0.0
    %234 = vmatpush1.msra.mxu0 0.0
    %235 = vmatprep.subr.mxu0 0.0
    %236 = vmatpush1.msra.mxu0 0.0
    %237 = vmatprep.subr.mxu0 0.0
    %238 = vmatpush1.msra.mxu0 0.0
    %239 = vmatprep.subr.mxu0 0.0
    %240 = vmatpush1.msra.mxu0 0.0
    %241 = vmatprep.subr.mxu0 0.0
    %242 = vmatpush1.msra.mxu0 0.0
    %243 = vmatprep.subr.mxu0 0.0
    %244 = vmatpush1.msra.mxu0 0.0
    %245 = vmatprep.subr.mxu0 0.0
    %246 = vmatpush1.msra.mxu0 0.0
    %247 = vmatprep.mubr.f32.mxu0 0.0
    %248 = vmatmul.mubr.f32.gmra.mrb[0].mxu0 %v181
    %v249 = vpop.f32.mrb[0].mxu0
    %v250 = vadd.f32 0.0, %v249
    %v251 = vpop.f32.mrb[0].mxu0
    %252 = vdwg.mxu0
    %v254 = vrot.slane %v250, 1
    %v257 = vadd.f32 %v174, %v250
    %v258 = vadd.f32 %v175, %v254
    %v259 = vxor.u32 %v257, 2147483648
    %v260 = vxor.u32 %v258, 2147483648
    %v261 = vmul.f32 %v259, 1.442695
    %v262 = vpow.pop %v261
    %v263 = vmul.f32 %v260, 1.442695
    %v264 = vpow.pop %v263
    %v265 = vadd.f32 %v262, 1.0
    %v266 = vadd.f32 %v264, 1.0
    %v267 = vrcp.pop %v265
    %v268 = vmul.f32 1.0, %v267
    %v269 = vrcp.pop %v266
    %v270 = vmul.f32 1.0, %v269
    %v271 = vtanh.pop %v257
    %v272 = vtanh.pop %v258
    %v273 = vmul.f32 %v268, %v149
    %v274 = vmul.f32 %v270, %v150
    %277 = vrot.lane.b32.xlu0 %v271, 64
    %v278 = vpop.permute.xlu0 %277
    %279 = vrot.lane.b32.xlu0 %v272, 64
    %v280 = vpop.permute.xlu0 %279
    %v283 = vmul.f32 %v268, %v278
    %v284 = vmul.f32 %v270, %v280
    %287 = vrot.lane.b32.xlu0 %v283, 32
    %v288 = vpop.permute.xlu0 %287
    %289 = vrot.lane.b32.xlu0 %v284, 32
    %v290 = vpop.permute.xlu0 %289
    %v293 = vadd.f32 %v273, %v288
    %v294 = vadd.f32 %v274, %v290
    %v295 = vtanh.pop %v293
    %v296 = vtanh.pop %v294
    %299 = vrot.lane.b32.xlu0 %v295, 64
    %v300 = vpop.permute.xlu0 %299
    %301 = vrot.lane.b32.xlu0 %v296, 64
    %v302 = vpop.permute.xlu0 %301
    %v305 = vmul.f32 %v268, %v300
    %v306 = vmul.f32 %v270, %v302
    %309 = vrot.lane.b32.xlu0 %v305, 32
    %v310 = vpop.permute.xlu0 %309
    %311 = vrot.lane.b32.xlu0 %v306, 32
    %v312 = vpop.permute.xlu0 %311
    %315 = vst.msk [vmem:[#allocation4 + $0x1] sm:$0x1] %vm171, %v310
    %316 = vst.msk [vmem:[#allocation4 + $0x9] sm:$0x1] %vm171, %v312
    %v317 = vld [vmem:[%s0 + $0x2] sm:$0x1]
    %v318 = vld [vmem:[%s0 + $0xa] sm:$0x1]
    %v319 = vrot.slane %v306, 7
    %v320 = vsel %vm177, %v319, %v305
    %321 = vrot.lane.b32.xlu0 %v320, 32
    %v322 = vpop.permute.xlu0 %321
    %v323 = vsel %vm27, %v322, 0
    %325 = vmatprep.subr.mxu0 0.0
    %326 = vmatpush1.msra.mxu0 %v21
    %327 = vmatprep.subr.mxu0 0.0
    %328 = vmatpush1.msra.mxu0 %v22
    %329 = vmatprep.subr.mxu0 0.0
    %330 = vmatpush1.msra.mxu0 %v23
    %331 = vmatprep.subr.mxu0 0.0
    %332 = vmatpush1.msra.mxu0 %v24
    %333 = vmatprep.subr.mxu0 0.0
    %334 = vmatpush1.msra.mxu0 0.0
    %335 = vmatprep.subr.mxu0 0.0
    %336 = vmatpush1.msra.mxu0 0.0
    %337 = vmatprep.subr.mxu0 0.0
    %338 = vmatpush1.msra.mxu0 0.0
    %339 = vmatprep.subr.mxu0 0.0
    %340 = vmatpush1.msra.mxu0 0.0
    %341 = vmatprep.subr.mxu0 0.0
    %342 = vmatpush1.msra.mxu0 0.0
    %343 = vmatprep.subr.mxu0 0.0
    %344 = vmatpush1.msra.mxu0 0.0
    %345 = vmatprep.subr.mxu0 0.0
    %346 = vmatpush1.msra.mxu0 0.0
    %347 = vmatprep.subr.mxu0 0.0
    %348 = vmatpush1.msra.mxu0 0.0
    %349 = vmatprep.subr.mxu0 0.0
    %350 = vmatpush1.msra.mxu0 0.0
    %351 = vmatprep.subr.mxu0 0.0
    %352 = vmatpush1.msra.mxu0 0.0
    %353 = vmatprep.subr.mxu0 0.0
    %354 = vmatpush1.msra.mxu0 0.0
    %355 = vmatprep.subr.mxu0 0.0
    %356 = vmatpush1.msra.mxu0 0.0
    %357 = vmatprep.subr.mxu0 0.0
    %358 = vmatpush1.msra.mxu0 0.0
    %359 = vmatprep.subr.mxu0 0.0
    %360 = vmatpush1.msra.mxu0 0.0
    %361 = vmatprep.subr.mxu0 0.0
    %362 = vmatpush1.msra.mxu0 0.0
    %363 = vmatprep.subr.mxu0 0.0
    %364 = vmatpush1.msra.mxu0 0.0
    %365 = vmatprep.subr.mxu0 0.0
    %366 = vmatpush1.msra.mxu0 0.0
    %367 = vmatprep.subr.mxu0 0.0
    %368 = vmatpush1.msra.mxu0 0.0
    %369 = vmatprep.subr.mxu0 0.0
    %370 = vmatpush1.msra.mxu0 0.0
    %371 = vmatprep.subr.mxu0 0.0
    %372 = vmatpush1.msra.mxu0 0.0
    %373 = vmatprep.subr.mxu0 0.0
    %374 = vmatpush1.msra.mxu0 0.0
    %375 = vmatprep.subr.mxu0 0.0
    %376 = vmatpush1.msra.mxu0 0.0
    %377 = vmatprep.subr.mxu0 0.0
    %378 = vmatpush1.msra.mxu0 0.0
    %379 = vmatprep.subr.mxu0 0.0
    %380 = vmatpush1.msra.mxu0 0.0
    %381 = vmatprep.subr.mxu0 0.0
    %382 = vmatpush1.msra.mxu0 0.0
    %383 = vmatprep.subr.mxu0 0.0
    %384 = vmatpush1.msra.mxu0 0.0
    %385 = vmatprep.subr.mxu0 0.0
    %386 = vmatpush1.msra.mxu0 0.0
    %387 = vmatprep.subr.mxu0 0.0
    %388 = vmatpush1.msra.mxu0 0.0
    %389 = vmatprep.mubr.f32.mxu0 0.0
    %390 = vmatmul.mubr.f32.gmra.mrb[0].mxu0 %v323
    %v391 = vpop.f32.mrb[0].mxu0
    %v392 = vadd.f32 0.0, %v391
    %v393 = vpop.f32.mrb[0].mxu0
    %394 = vdwg.mxu0
    %v396 = vrot.slane %v392, 1
    %v399 = vadd.f32 %v317, %v392
    %v400 = vadd.f32 %v318, %v396
    %v401 = vxor.u32 %v399, 2147483648
    %v402 = vxor.u32 %v400, 2147483648
    %v403 = vmul.f32 %v401, 1.442695
    %v404 = vpow.pop %v403
    %v405 = vmul.f32 %v402, 1.442695
    %v406 = vpow.pop %v405
    %v407 = vadd.f32 %v404, 1.0
    %v408 = vadd.f32 %v406, 1.0
    %v409 = vrcp.pop %v407
    %v410 = vmul.f32 1.0, %v409
    %v411 = vrcp.pop %v408
    %v412 = vmul.f32 1.0, %v411
    %v413 = vtanh.pop %v399
    %v414 = vtanh.pop %v400
    %v415 = vmul.f32 %v410, %v293
    %v416 = vmul.f32 %v412, %v294
    %419 = vrot.lane.b32.xlu0 %v413, 64
    %v420 = vpop.permute.xlu0 %419
    %421 = vrot.lane.b32.xlu0 %v414, 64
    %v422 = vpop.permute.xlu0 %421
    %v425 = vmul.f32 %v410, %v420
    %v426 = vmul.f32 %v412, %v422
    %429 = vrot.lane.b32.xlu0 %v425, 32
    %v430 = vpop.permute.xlu0 %429
    %431 = vrot.lane.b32.xlu0 %v426, 32
    %v432 = vpop.permute.xlu0 %431
    %v435 = vadd.f32 %v415, %v430
    %v436 = vadd.f32 %v416, %v432
    %v437 = vtanh.pop %v435
    %v438 = vtanh.pop %v436
    %441 = vrot.lane.b32.xlu0 %v437, 64
    %v442 = vpop.permute.xlu0 %441
    %443 = vrot.lane.b32.xlu0 %v438, 64
    %v444 = vpop.permute.xlu0 %443
    %v447 = vmul.f32 %v410, %v442
    %v448 = vmul.f32 %v412, %v444
    %451 = vrot.lane.b32.xlu0 %v447, 32
    %v452 = vpop.permute.xlu0 %451
    %453 = vrot.lane.b32.xlu0 %v448, 32
    %v454 = vpop.permute.xlu0 %453
    %457 = vst.msk [vmem:[#allocation4 + $0x2] sm:$0x1] %vm171, %v452
    %458 = vst.msk [vmem:[#allocation4 + $0xa] sm:$0x1] %vm171, %v454
    %v459 = vld [vmem:[%s0 + $0x3] sm:$0x1]
    %v460 = vld [vmem:[%s0 + $0xb] sm:$0x1]
    %v461 = vrot.slane %v448, 7
    %v462 = vsel %vm177, %v461, %v447
    %463 = vrot.lane.b32.xlu0 %v462, 32
    %v464 = vpop.permute.xlu0 %463
    %v465 = vsel %vm27, %v464, 0
    %467 = vmatprep.subr.mxu0 0.0
    %468 = vmatpush1.msra.mxu0 %v21
    %469 = vmatprep.subr.mxu0 0.0
    %470 = vmatpush1.msra.mxu0 %v22
    %471 = vmatprep.subr.mxu0 0.0
    %472 = vmatpush1.msra.mxu0 %v23
    %473 = vmatprep.subr.mxu0 0.0
    %474 = vmatpush1.msra.mxu0 %v24
    %475 = vmatprep.subr.mxu0 0.0
    %476 = vmatpush1.msra.mxu0 0.0
    %477 = vmatprep.subr.mxu0 0.0
    %478 = vmatpush1.msra.mxu0 0.0
    %479 = vmatprep.subr.mxu0 0.0
    %480 = vmatpush1.msra.mxu0 0.0
    %481 = vmatprep.subr.mxu0 0.0
    %482 = vmatpush1.msra.mxu0 0.0
    %483 = vmatprep.subr.mxu0 0.0
    %484 = vmatpush1.msra.mxu0 0.0
    %485 = vmatprep.subr.mxu0 0.0
    %486 = vmatpush1.msra.mxu0 0.0
    %487 = vmatprep.subr.mxu0 0.0
    %488 = vmatpush1.msra.mxu0 0.0
    %489 = vmatprep.subr.mxu0 0.0
    %490 = vmatpush1.msra.mxu0 0.0
    %491 = vmatprep.subr.mxu0 0.0
    %492 = vmatpush1.msra.mxu0 0.0
    %493 = vmatprep.subr.mxu0 0.0
    %494 = vmatpush1.msra.mxu0 0.0
    %495 = vmatprep.subr.mxu0 0.0
    %496 = vmatpush1.msra.mxu0 0.0
    %497 = vmatprep.subr.mxu0 0.0
    %498 = vmatpush1.msra.mxu0 0.0
    %499 = vmatprep.subr.mxu0 0.0
    %500 = vmatpush1.msra.mxu0 0.0
    %501 = vmatprep.subr.mxu0 0.0
    %502 = vmatpush1.msra.mxu0 0.0
    %503 = vmatprep.subr.mxu0 0.0
    %504 = vmatpush1.msra.mxu0 0.0
    %505 = vmatprep.subr.mxu0 0.0
    %506 = vmatpush1.msra.mxu0 0.0
    %507 = vmatprep.subr.mxu0 0.0
    %508 = vmatpush1.msra.mxu0 0.0
    %509 = vmatprep.subr.mxu0 0.0
    %510 = vmatpush1.msra.mxu0 0.0
    %511 = vmatprep.subr.mxu0 0.0
    %512 = vmatpush1.msra.mxu0 0.0
    %513 = vmatprep.subr.mxu0 0.0
    %514 = vmatpush1.msra.mxu0 0.0
    %515 = vmatprep.subr.mxu0 0.0
    %516 = vmatpush1.msra.mxu0 0.0
    %517 = vmatprep.subr.mxu0 0.0
    %518 = vmatpush1.msra.mxu0 0.0
    %519 = vmatprep.subr.mxu0 0.0
    %520 = vmatpush1.msra.mxu0 0.0
    %521 = vmatprep.subr.mxu0 0.0
    %522 = vmatpush1.msra.mxu0 0.0
    %523 = vmatprep.subr.mxu0 0.0
    %524 = vmatpush1.msra.mxu0 0.0
    %525 = vmatprep.subr.mxu0 0.0
    %526 = vmatpush1.msra.mxu0 0.0
    %527 = vmatprep.subr.mxu0 0.0
    %528 = vmatpush1.msra.mxu0 0.0
    %529 = vmatprep.subr.mxu0 0.0
    %530 = vmatpush1.msra.mxu0 0.0
    %531 = vmatprep.mubr.f32.mxu0 0.0
    %532 = vmatmul.mubr.f32.gmra.mrb[0].mxu0 %v465
    %v533 = vpop.f32.mrb[0].mxu0
    %v534 = vadd.f32 0.0, %v533
    %v535 = vpop.f32.mrb[0].mxu0
    %536 = vdwg.mxu0
    %v538 = vrot.slane %v534, 1
    %v541 = vadd.f32 %v459, %v534
    %v542 = vadd.f32 %v460, %v538
    %v543 = vxor.u32 %v541, 2147483648
    %v544 = vxor.u32 %v542, 2147483648
    %v545 = vmul.f32 %v543, 1.442695
    %v546 = vpow.pop %v545
    %v547 = vmul.f32 %v544, 1.442695
    %v548 = vpow.pop %v547
    %v549 = vadd.f32 %v546, 1.0
    %v550 = vadd.f32 %v548, 1.0
    %v551 = vrcp.pop %v549
    %v552 = vmul.f32 1.0, %v551
    %v553 = vrcp.pop %v550
    %v554 = vmul.f32 1.0, %v553
    %v555 = vtanh.pop %v541
    %v556 = vtanh.pop %v542
    %v557 = vmul.f32 %v552, %v435
    %v558 = vmul.f32 %v554, %v436
    %561 = vrot.lane.b32.xlu0 %v555, 64
    %v562 = vpop.permute.xlu0 %561
    %563 = vrot.lane.b32.xlu0 %v556, 64
    %v564 = vpop.permute.xlu0 %563
    %v567 = vmul.f32 %v552, %v562
    %v568 = vmul.f32 %v554, %v564
    %571 = vrot.lane.b32.xlu0 %v567, 32
    %v572 = vpop.permute.xlu0 %571
    %573 = vrot.lane.b32.xlu0 %v568, 32
    %v574 = vpop.permute.xlu0 %573
    %v577 = vadd.f32 %v557, %v572
    %v578 = vadd.f32 %v558, %v574
    %v579 = vtanh.pop %v577
    %v580 = vtanh.pop %v578
    %583 = vrot.lane.b32.xlu0 %v579, 64
    %v584 = vpop.permute.xlu0 %583
    %585 = vrot.lane.b32.xlu0 %v580, 64
    %v586 = vpop.permute.xlu0 %585
    %v589 = vmul.f32 %v552, %v584
    %v590 = vmul.f32 %v554, %v586
    %593 = vrot.lane.b32.xlu0 %v589, 32
    %v594 = vpop.permute.xlu0 %593
    %595 = vrot.lane.b32.xlu0 %v590, 32
    %v596 = vpop.permute.xlu0 %595
    %599 = vst.msk [vmem:[#allocation4 + $0x3] sm:$0x1] %vm171, %v594
    %600 = vst.msk [vmem:[#allocation4 + $0xb] sm:$0x1] %vm171, %v596
    %v601 = vld [vmem:[%s0 + $0x4] sm:$0x1]
    %v602 = vld [vmem:[%s0 + $0xc] sm:$0x1]
    %v603 = vrot.slane %v590, 7
    %v604 = vsel %vm177, %v603, %v589
    %605 = vrot.lane.b32.xlu0 %v604, 32
    %v606 = vpop.permute.xlu0 %605
    %v607 = vsel %vm27, %v606, 0
    %609 = vmatprep.subr.mxu0 0.0
    %610 = vmatpush1.msra.mxu0 %v21
    %611 = vmatprep.subr.mxu0 0.0
    %612 = vmatpush1.msra.mxu0 %v22
    %613 = vmatprep.subr.mxu0 0.0
    %614 = vmatpush1.msra.mxu0 %v23
    %615 = vmatprep.subr.mxu0 0.0
    %616 = vmatpush1.msra.mxu0 %v24
    %617 = vmatprep.subr.mxu0 0.0
    %618 = vmatpush1.msra.mxu0 0.0
    %619 = vmatprep.subr.mxu0 0.0
    %620 = vmatpush1.msra.mxu0 0.0
    %621 = vmatprep.subr.mxu0 0.0
    %622 = vmatpush1.msra.mxu0 0.0
    %623 = vmatprep.subr.mxu0 0.0
    %624 = vmatpush1.msra.mxu0 0.0
    %625 = vmatprep.subr.mxu0 0.0
    %626 = vmatpush1.msra.mxu0 0.0
    %627 = vmatprep.subr.mxu0 0.0
    %628 = vmatpush1.msra.mxu0 0.0
    %629 = vmatprep.subr.mxu0 0.0
    %630 = vmatpush1.msra.mxu0 0.0
    %631 = vmatprep.subr.mxu0 0.0
    %632 = vmatpush1.msra.mxu0 0.0
    %633 = vmatprep.subr.mxu0 0.0
    %634 = vmatpush1.msra.mxu0 0.0
    %635 = vmatprep.subr.mxu0 0.0
    %636 = vmatpush1.msra.mxu0 0.0
    %637 = vmatprep.subr.mxu0 0.0
    %638 = vmatpush1.msra.mxu0 0.0
    %639 = vmatprep.subr.mxu0 0.0
    %640 = vmatpush1.msra.mxu0 0.0
    %641 = vmatprep.subr.mxu0 0.0
    %642 = vmatpush1.msra.mxu0 0.0
    %643 = vmatprep.subr.mxu0 0.0
    %644 = vmatpush1.msra.mxu0 0.0
    %645 = vmatprep.subr.mxu0 0.0
    %646 = vmatpush1.msra.mxu0 0.0
    %647 = vmatprep.subr.mxu0 0.0
    %648 = vmatpush1.msra.mxu0 0.0
    %649 = vmatprep.subr.mxu0 0.0
    %650 = vmatpush1.msra.mxu0 0.0
    %651 = vmatprep.subr.mxu0 0.0
    %652 = vmatpush1.msra.mxu0 0.0
    %653 = vmatprep.subr.mxu0 0.0
    %654 = vmatpush1.msra.mxu0 0.0
    %655 = vmatprep.subr.mxu0 0.0
    %656 = vmatpush1.msra.mxu0 0.0
    %657 = vmatprep.subr.mxu0 0.0
    %658 = vmatpush1.msra.mxu0 0.0
    %659 = vmatprep.subr.mxu0 0.0
    %660 = vmatpush1.msra.mxu0 0.0
    %661 = vmatprep.subr.mxu0 0.0
    %662 = vmatpush1.msra.mxu0 0.0
    %663 = vmatprep.subr.mxu0 0.0
    %664 = vmatpush1.msra.mxu0 0.0
    %665 = vmatprep.subr.mxu0 0.0
    %666 = vmatpush1.msra.mxu0 0.0
    %667 = vmatprep.subr.mxu0 0.0
    %668 = vmatpush1.msra.mxu0 0.0
    %669 = vmatprep.subr.mxu0 0.0
    %670 = vmatpush1.msra.mxu0 0.0
    %671 = vmatprep.subr.mxu0 0.0
    %672 = vmatpush1.msra.mxu0 0.0
    %673 = vmatprep.mubr.f32.mxu0 0.0
    %674 = vmatmul.mubr.f32.gmra.mrb[0].mxu0 %v607
    %v675 = vpop.f32.mrb[0].mxu0
    %v676 = vadd.f32 0.0, %v675
    %v677 = vpop.f32.mrb[0].mxu0
    %678 = vdwg.mxu0
    %v680 = vrot.slane %v676, 1
    %v683 = vadd.f32 %v601, %v676
    %v684 = vadd.f32 %v602, %v680
    %v685 = vxor.u32 %v683, 2147483648
    %v686 = vxor.u32 %v684, 2147483648
    %v687 = vmul.f32 %v685, 1.442695
    %v688 = vpow.pop %v687
    %v689 = vmul.f32 %v686, 1.442695
    %v690 = vpow.pop %v689
    %v691 = vadd.f32 %v688, 1.0
    %v692 = vadd.f32 %v690, 1.0
    %v693 = vrcp.pop %v691
    %v694 = vmul.f32 1.0, %v693
    %v695 = vrcp.pop %v692
    %v696 = vmul.f32 1.0, %v695
    %v697 = vtanh.pop %v683
    %v698 = vtanh.pop %v684
    %v699 = vmul.f32 %v694, %v577
    %v700 = vmul.f32 %v696, %v578
    %703 = vrot.lane.b32.xlu0 %v697, 64
    %v704 = vpop.permute.xlu0 %703
    %705 = vrot.lane.b32.xlu0 %v698, 64
    %v706 = vpop.permute.xlu0 %705
    %v709 = vmul.f32 %v694, %v704
    %v710 = vmul.f32 %v696, %v706
    %713 = vrot.lane.b32.xlu0 %v709, 32
    %v714 = vpop.permute.xlu0 %713
    %715 = vrot.lane.b32.xlu0 %v710, 32
    %v716 = vpop.permute.xlu0 %715
    %v719 = vadd.f32 %v699, %v714
    %v720 = vadd.f32 %v700, %v716
    %v721 = vtanh.pop %v719
    %v722 = vtanh.pop %v720
    %725 = vrot.lane.b32.xlu0 %v721, 64
    %v726 = vpop.permute.xlu0 %725
    %727 = vrot.lane.b32.xlu0 %v722, 64
    %v728 = vpop.permute.xlu0 %727
    %v731 = vmul.f32 %v694, %v726
    %v732 = vmul.f32 %v696, %v728
    %735 = vrot.lane.b32.xlu0 %v731, 32
    %v736 = vpop.permute.xlu0 %735
    %737 = vrot.lane.b32.xlu0 %v732, 32
    %v738 = vpop.permute.xlu0 %737
    %741 = vst.msk [vmem:[#allocation4 + $0x4] sm:$0x1] %vm171, %v736
    %742 = vst.msk [vmem:[#allocation4 + $0xc] sm:$0x1] %vm171, %v738
    %v743 = vld [vmem:[%s0 + $0x5] sm:$0x1]
    %v744 = vld [vmem:[%s0 + $0xd] sm:$0x1]
    %v745 = vrot.slane %v732, 7
    %v746 = vsel %vm177, %v745, %v731
    %747 = vrot.lane.b32.xlu0 %v746, 32
    %v748 = vpop.permute.xlu0 %747
    %v749 = vsel %vm27, %v748, 0
    %751 = vmatprep.subr.mxu0 0.0
    %752 = vmatpush1.msra.mxu0 %v21
    %753 = vmatprep.subr.mxu0 0.0
    %754 = vmatpush1.msra.mxu0 %v22
    %755 = vmatprep.subr.mxu0 0.0
    %756 = vmatpush1.msra.mxu0 %v23
    %757 = vmatprep.subr.mxu0 0.0
    %758 = vmatpush1.msra.mxu0 %v24
    %759 = vmatprep.subr.mxu0 0.0
    %760 = vmatpush1.msra.mxu0 0.0
    %761 = vmatprep.subr.mxu0 0.0
    %762 = vmatpush1.msra.mxu0 0.0
    %763 = vmatprep.subr.mxu0 0.0
    %764 = vmatpush1.msra.mxu0 0.0
    %765 = vmatprep.subr.mxu0 0.0
    %766 = vmatpush1.msra.mxu0 0.0
    %767 = vmatprep.subr.mxu0 0.0
    %768 = vmatpush1.msra.mxu0 0.0
    %769 = vmatprep.subr.mxu0 0.0
    %770 = vmatpush1.msra.mxu0 0.0
    %771 = vmatprep.subr.mxu0 0.0
    %772 = vmatpush1.msra.mxu0 0.0
    %773 = vmatprep.subr.mxu0 0.0
    %774 = vmatpush1.msra.mxu0 0.0
    %775 = vmatprep.subr.mxu0 0.0
    %776 = vmatpush1.msra.mxu0 0.0
    %777 = vmatprep.subr.mxu0 0.0
    %778 = vmatpush1.msra.mxu0 0.0
    %779 = vmatprep.subr.mxu0 0.0
    %780 = vmatpush1.msra.mxu0 0.0
    %781 = vmatprep.subr.mxu0 0.0
    %782 = vmatpush1.msra.mxu0 0.0
    %783 = vmatprep.subr.mxu0 0.0
    %784 = vmatpush1.msra.mxu0 0.0
    %785 = vmatprep.subr.mxu0 0.0
    %786 = vmatpush1.msra.mxu0 0.0
    %787 = vmatprep.subr.mxu0 0.0
    %788 = vmatpush1.msra.mxu0 0.0
    %789 = vmatprep.subr.mxu0 0.0
    %790 = vmatpush1.msra.mxu0 0.0
    %791 = vmatprep.subr.mxu0 0.0
    %792 = vmatpush1.msra.mxu0 0.0
    %793 = vmatprep.subr.mxu0 0.0
    %794 = vmatpush1.msra.mxu0 0.0
    %795 = vmatprep.subr.mxu0 0.0
    %796 = vmatpush1.msra.mxu0 0.0
    %797 = vmatprep.subr.mxu0 0.0
    %798 = vmatpush1.msra.mxu0 0.0
    %799 = vmatprep.subr.mxu0 0.0
    %800 = vmatpush1.msra.mxu0 0.0
    %801 = vmatprep.subr.mxu0 0.0
    %802 = vmatpush1.msra.mxu0 0.0
    %803 = vmatprep.subr.mxu0 0.0
    %804 = vmatpush1.msra.mxu0 0.0
    %805 = vmatprep.subr.mxu0 0.0
    %806 = vmatpush1.msra.mxu0 0.0
    %807 = vmatprep.subr.mxu0 0.0
    %808 = vmatpush1.msra.mxu0 0.0
    %809 = vmatprep.subr.mxu0 0.0
    %810 = vmatpush1.msra.mxu0 0.0
    %811 = vmatprep.subr.mxu0 0.0
    %812 = vmatpush1.msra.mxu0 0.0
    %813 = vmatprep.subr.mxu0 0.0
    %814 = vmatpush1.msra.mxu0 0.0
    %815 = vmatprep.mubr.f32.mxu0 0.0
    %816 = vmatmul.mubr.f32.gmra.mrb[0].mxu0 %v749
    %v817 = vpop.f32.mrb[0].mxu0
    %v818 = vadd.f32 0.0, %v817
    %v819 = vpop.f32.mrb[0].mxu0
    %820 = vdwg.mxu0
    %v822 = vrot.slane %v818, 1
    %v825 = vadd.f32 %v743, %v818
    %v826 = vadd.f32 %v744, %v822
    %v827 = vxor.u32 %v825, 2147483648
    %v828 = vxor.u32 %v826, 2147483648
    %v829 = vmul.f32 %v827, 1.442695
    %v830 = vpow.pop %v829
    %v831 = vmul.f32 %v828, 1.442695
    %v832 = vpow.pop %v831
    %v833 = vadd.f32 %v830, 1.0
    %v834 = vadd.f32 %v832, 1.0
    %v835 = vrcp.pop %v833
    %v836 = vmul.f32 1.0, %v835
    %v837 = vrcp.pop %v834
    %v838 = vmul.f32 1.0, %v837
    %v839 = vtanh.pop %v825
    %v840 = vtanh.pop %v826
    %v841 = vmul.f32 %v836, %v719
    %v842 = vmul.f32 %v838, %v720
    %845 = vrot.lane.b32.xlu0 %v839, 64
    %v846 = vpop.permute.xlu0 %845
    %847 = vrot.lane.b32.xlu0 %v840, 64
    %v848 = vpop.permute.xlu0 %847
    %v851 = vmul.f32 %v836, %v846
    %v852 = vmul.f32 %v838, %v848
    %855 = vrot.lane.b32.xlu0 %v851, 32
    %v856 = vpop.permute.xlu0 %855
    %857 = vrot.lane.b32.xlu0 %v852, 32
    %v858 = vpop.permute.xlu0 %857
    %v861 = vadd.f32 %v841, %v856
    %v862 = vadd.f32 %v842, %v858
    %v863 = vtanh.pop %v861
    %v864 = vtanh.pop %v862
    %867 = vrot.lane.b32.xlu0 %v863, 64
    %v868 = vpop.permute.xlu0 %867
    %869 = vrot.lane.b32.xlu0 %v864, 64
    %v870 = vpop.permute.xlu0 %869
    %v873 = vmul.f32 %v836, %v868
    %v874 = vmul.f32 %v838, %v870
    %877 = vrot.lane.b32.xlu0 %v873, 32
    %v878 = vpop.permute.xlu0 %877
    %879 = vrot.lane.b32.xlu0 %v874, 32
    %v880 = vpop.permute.xlu0 %879
    %883 = vst.msk [vmem:[#allocation4 + $0x5] sm:$0x1] %vm171, %v878
    %884 = vst.msk [vmem:[#allocation4 + $0xd] sm:$0x1] %vm171, %v880
    %v885 = vld [vmem:[%s0 + $0x6] sm:$0x1]
    %v886 = vld [vmem:[%s0 + $0xe] sm:$0x1]
    %v887 = vrot.slane %v874, 7
    %v888 = vsel %vm177, %v887, %v873
    %889 = vrot.lane.b32.xlu0 %v888, 32
    %v890 = vpop.permute.xlu0 %889
    %v891 = vsel %vm27, %v890, 0
    %893 = vmatprep.subr.mxu0 0.0
    %894 = vmatpush1.msra.mxu0 %v21
    %895 = vmatprep.subr.mxu0 0.0
    %896 = vmatpush1.msra.mxu0 %v22
    %897 = vmatprep.subr.mxu0 0.0
    %898 = vmatpush1.msra.mxu0 %v23
    %899 = vmatprep.subr.mxu0 0.0
    %900 = vmatpush1.msra.mxu0 %v24
    %901 = vmatprep.subr.mxu0 0.0
    %902 = vmatpush1.msra.mxu0 0.0
    %903 = vmatprep.subr.mxu0 0.0
    %904 = vmatpush1.msra.mxu0 0.0
    %905 = vmatprep.subr.mxu0 0.0
    %906 = vmatpush1.msra.mxu0 0.0
    %907 = vmatprep.subr.mxu0 0.0
    %908 = vmatpush1.msra.mxu0 0.0
    %909 = vmatprep.subr.mxu0 0.0
    %910 = vmatpush1.msra.mxu0 0.0
    %911 = vmatprep.subr.mxu0 0.0
    %912 = vmatpush1.msra.mxu0 0.0
    %913 = vmatprep.subr.mxu0 0.0
    %914 = vmatpush1.msra.mxu0 0.0
    %915 = vmatprep.subr.mxu0 0.0
    %916 = vmatpush1.msra.mxu0 0.0
    %917 = vmatprep.subr.mxu0 0.0
    %918 = vmatpush1.msra.mxu0 0.0
    %919 = vmatprep.subr.mxu0 0.0
    %920 = vmatpush1.msra.mxu0 0.0
    %921 = vmatprep.subr.mxu0 0.0
    %922 = vmatpush1.msra.mxu0 0.0
    %923 = vmatprep.subr.mxu0 0.0
    %924 = vmatpush1.msra.mxu0 0.0
    %925 = vmatprep.subr.mxu0 0.0
    %926 = vmatpush1.msra.mxu0 0.0
    %927 = vmatprep.subr.mxu0 0.0
    %928 = vmatpush1.msra.mxu0 0.0
    %929 = vmatprep.subr.mxu0 0.0
    %930 = vmatpush1.msra.mxu0 0.0
    %931 = vmatprep.subr.mxu0 0.0
    %932 = vmatpush1.msra.mxu0 0.0
    %933 = vmatprep.subr.mxu0 0.0
    %934 = vmatpush1.msra.mxu0 0.0
    %935 = vmatprep.subr.mxu0 0.0
    %936 = vmatpush1.msra.mxu0 0.0
    %937 = vmatprep.subr.mxu0 0.0
    %938 = vmatpush1.msra.mxu0 0.0
    %939 = vmatprep.subr.mxu0 0.0
    %940 = vmatpush1.msra.mxu0 0.0
    %941 = vmatprep.subr.mxu0 0.0
    %942 = vmatpush1.msra.mxu0 0.0
    %943 = vmatprep.subr.mxu0 0.0
    %944 = vmatpush1.msra.mxu0 0.0
    %945 = vmatprep.subr.mxu0 0.0
    %946 = vmatpush1.msra.mxu0 0.0
    %947 = vmatprep.subr.mxu0 0.0
    %948 = vmatpush1.msra.mxu0 0.0
    %949 = vmatprep.subr.mxu0 0.0
    %950 = vmatpush1.msra.mxu0 0.0
    %951 = vmatprep.subr.mxu0 0.0
    %952 = vmatpush1.msra.mxu0 0.0
    %953 = vmatprep.subr.mxu0 0.0
    %954 = vmatpush1.msra.mxu0 0.0
    %955 = vmatprep.subr.mxu0 0.0
    %956 = vmatpush1.msra.mxu0 0.0
    %957 = vmatprep.mubr.f32.mxu0 0.0
    %958 = vmatmul.mubr.f32.gmra.mrb[0].mxu0 %v891
    %v959 = vpop.f32.mrb[0].mxu0
    %v960 = vadd.f32 0.0, %v959
    %v961 = vpop.f32.mrb[0].mxu0
    %962 = vdwg.mxu0
    %v964 = vrot.slane %v960, 1
    %v967 = vadd.f32 %v885, %v960
    %v968 = vadd.f32 %v886, %v964
    %v969 = vxor.u32 %v967, 2147483648
    %v970 = vxor.u32 %v968, 2147483648
    %v971 = vmul.f32 %v969, 1.442695
    %v972 = vpow.pop %v971
    %v973 = vmul.f32 %v970, 1.442695
    %v974 = vpow.pop %v973
    %v975 = vadd.f32 %v972, 1.0
    %v976 = vadd.f32 %v974, 1.0
    %v977 = vrcp.pop %v975
    %v978 = vmul.f32 1.0, %v977
    %v979 = vrcp.pop %v976
    %v980 = vmul.f32 1.0, %v979
    %v981 = vtanh.pop %v967
    %v982 = vtanh.pop %v968
    %v983 = vmul.f32 %v978, %v861
    %v984 = vmul.f32 %v980, %v862
    %987 = vrot.lane.b32.xlu0 %v981, 64
    %v988 = vpop.permute.xlu0 %987
    %989 = vrot.lane.b32.xlu0 %v982, 64
    %v990 = vpop.permute.xlu0 %989
    %v993 = vmul.f32 %v978, %v988
    %v994 = vmul.f32 %v980, %v990
    %997 = vrot.lane.b32.xlu0 %v993, 32
    %v998 = vpop.permute.xlu0 %997
    %999 = vrot.lane.b32.xlu0 %v994, 32
    %v1000 = vpop.permute.xlu0 %999
    %v1003 = vadd.f32 %v983, %v998
    %v1004 = vadd.f32 %v984, %v1000
    %v1005 = vtanh.pop %v1003
    %v1006 = vtanh.pop %v1004
    %1009 = vrot.lane.b32.xlu0 %v1005, 64
    %v1010 = vpop.permute.xlu0 %1009
    %1011 = vrot.lane.b32.xlu0 %v1006, 64
    %v1012 = vpop.permute.xlu0 %1011
    %v1015 = vmul.f32 %v978, %v1010
    %v1016 = vmul.f32 %v980, %v1012
    %1019 = vrot.lane.b32.xlu0 %v1015, 32
    %v1020 = vpop.permute.xlu0 %1019
    %1021 = vrot.lane.b32.xlu0 %v1016, 32
    %v1022 = vpop.permute.xlu0 %1021
    %1025 = vst.msk [vmem:[#allocation4 + $0x6] sm:$0x1] %vm171, %v1020
    %1026 = vst.msk [vmem:[#allocation4 + $0xe] sm:$0x1] %vm171, %v1022
    %v1027 = vld [vmem:[%s0 + $0x7] sm:$0x1]
    %v1028 = vld [vmem:[%s0 + $0xf] sm:$0x1]
    %v1029 = vrot.slane %v1016, 7
    %v1030 = vsel %vm177, %v1029, %v1015
    %1031 = vrot.lane.b32.xlu0 %v1030, 32
    %v1032 = vpop.permute.xlu0 %1031
    %v1033 = vsel %vm27, %v1032, 0
    %1035 = vmatprep.subr.mxu0 0.0
    %1036 = vmatpush1.msra.mxu0 %v21
    %1037 = vmatprep.subr.mxu0 0.0
    %1038 = vmatpush1.msra.mxu0 %v22
    %1039 = vmatprep.subr.mxu0 0.0
    %1040 = vmatpush1.msra.mxu0 %v23
    %1041 = vmatprep.subr.mxu0 0.0
    %1042 = vmatpush1.msra.mxu0 %v24
    %1043 = vmatprep.subr.mxu0 0.0
    %1044 = vmatpush1.msra.mxu0 0.0
    %1045 = vmatprep.subr.mxu0 0.0
    %1046 = vmatpush1.msra.mxu0 0.0
    %1047 = vmatprep.subr.mxu0 0.0
    %1048 = vmatpush1.msra.mxu0 0.0
    %1049 = vmatprep.subr.mxu0 0.0
    %1050 = vmatpush1.msra.mxu0 0.0
    %1051 = vmatprep.subr.mxu0 0.0
    %1052 = vmatpush1.msra.mxu0 0.0
    %1053 = vmatprep.subr.mxu0 0.0
    %1054 = vmatpush1.msra.mxu0 0.0
    %1055 = vmatprep.subr.mxu0 0.0
    %1056 = vmatpush1.msra.mxu0 0.0
    %1057 = vmatprep.subr.mxu0 0.0
    %1058 = vmatpush1.msra.mxu0 0.0
    %1059 = vmatprep.subr.mxu0 0.0
    %1060 = vmatpush1.msra.mxu0 0.0
    %1061 = vmatprep.subr.mxu0 0.0
    %1062 = vmatpush1.msra.mxu0 0.0
    %1063 = vmatprep.subr.mxu0 0.0
    %1064 = vmatpush1.msra.mxu0 0.0
    %1065 = vmatprep.subr.mxu0 0.0
    %1066 = vmatpush1.msra.mxu0 0.0
    %1067 = vmatprep.subr.mxu0 0.0
    %1068 = vmatpush1.msra.mxu0 0.0
    %1069 = vmatprep.subr.mxu0 0.0
    %1070 = vmatpush1.msra.mxu0 0.0
    %1071 = vmatprep.subr.mxu0 0.0
    %1072 = vmatpush1.msra.mxu0 0.0
    %1073 = vmatprep.subr.mxu0 0.0
    %1074 = vmatpush1.msra.mxu0 0.0
    %1075 = vmatprep.subr.mxu0 0.0
    %1076 = vmatpush1.msra.mxu0 0.0
    %1077 = vmatprep.subr.mxu0 0.0
    %1078 = vmatpush1.msra.mxu0 0.0
    %1079 = vmatprep.subr.mxu0 0.0
    %1080 = vmatpush1.msra.mxu0 0.0
    %1081 = vmatprep.subr.mxu0 0.0
    %1082 = vmatpush1.msra.mxu0 0.0
    %1083 = vmatprep.subr.mxu0 0.0
    %1084 = vmatpush1.msra.mxu0 0.0
    %1085 = vmatprep.subr.mxu0 0.0
    %1086 = vmatpush1.msra.mxu0 0.0
    %1087 = vmatprep.subr.mxu0 0.0
    %1088 = vmatpush1.msra.mxu0 0.0
    %1089 = vmatprep.subr.mxu0 0.0
    %1090 = vmatpush1.msra.mxu0 0.0
    %1091 = vmatprep.subr.mxu0 0.0
    %1092 = vmatpush1.msra.mxu0 0.0
    %1093 = vmatprep.subr.mxu0 0.0
    %1094 = vmatpush1.msra.mxu0 0.0
    %1095 = vmatprep.subr.mxu0 0.0
    %1096 = vmatpush1.msra.mxu0 0.0
    %1097 = vmatprep.subr.mxu0 0.0
    %1098 = vmatpush1.msra.mxu0 0.0
    %1099 = vmatprep.mubr.f32.mxu0 0.0
    %1100 = vmatmul.mubr.f32.gmra.mrb[0].mxu0 %v1033
    %v1101 = vpop.f32.mrb[0].mxu0
    %v1102 = vadd.f32 0.0, %v1101
    %v1103 = vpop.f32.mrb[0].mxu0
    %1104 = vdwg.mxu0
    %v1106 = vrot.slane %v1102, 1
    %v1109 = vadd.f32 %v1027, %v1102
    %v1110 = vadd.f32 %v1028, %v1106
    %v1111 = vxor.u32 %v1109, 2147483648
    %v1112 = vxor.u32 %v1110, 2147483648
    %v1113 = vmul.f32 %v1111, 1.442695
    %v1114 = vpow.pop %v1113
    %v1115 = vmul.f32 %v1112, 1.442695
    %v1116 = vpow.pop %v1115
    %v1117 = vadd.f32 %v1114, 1.0
    %v1118 = vadd.f32 %v1116, 1.0
    %v1119 = vrcp.pop %v1117
    %v1120 = vmul.f32 1.0, %v1119
    %v1121 = vrcp.pop %v1118
    %v1122 = vmul.f32 1.0, %v1121
    %v1123 = vtanh.pop %v1109
    %v1124 = vtanh.pop %v1110
    %v1125 = vmul.f32 %v1120, %v1003
    %v1126 = vmul.f32 %v1122, %v1004
    %1129 = vrot.lane.b32.xlu0 %v1123, 64
    %v1130 = vpop.permute.xlu0 %1129
    %1131 = vrot.lane.b32.xlu0 %v1124, 64
    %v1132 = vpop.permute.xlu0 %1131
    %v1135 = vmul.f32 %v1120, %v1130
    %v1136 = vmul.f32 %v1122, %v1132
    %1139 = vrot.lane.b32.xlu0 %v1135, 32
    %v1140 = vpop.permute.xlu0 %1139
    %1141 = vrot.lane.b32.xlu0 %v1136, 32
    %v1142 = vpop.permute.xlu0 %1141
    %v1145 = vadd.f32 %v1125, %v1140
    %v1146 = vadd.f32 %v1126, %v1142
    %v1147 = vtanh.pop %v1145
    %v1148 = vtanh.pop %v1146
    %1151 = vrot.lane.b32.xlu0 %v1147, 64
    %v1152 = vpop.permute.xlu0 %1151
    %1153 = vrot.lane.b32.xlu0 %v1148, 64
    %v1154 = vpop.permute.xlu0 %1153
    %v1157 = vmul.f32 %v1120, %v1152
    %v1158 = vmul.f32 %v1122, %v1154
    %1161 = vrot.lane.b32.xlu0 %v1157, 32
    %v1162 = vpop.permute.xlu0 %1161
    %1163 = vrot.lane.b32.xlu0 %v1158, 32
    %v1164 = vpop.permute.xlu0 %1163
    %1167 = vst.msk [vmem:[#allocation4 + $0x7] sm:$0x1] %vm171, %v1162
    %1168 = vst.msk [vmem:[#allocation4 + $0xf] sm:$0x1] %vm171, %v1164
    %v1169 = vrot.slane %v1158, 7
    %v1170 = vsel %vm177, %v1169, %v1157
    %1171 = vrot.lane.b32.xlu0 %v1170, 32
    %v1172 = vpop.permute.xlu0 %1171
    %vm1174 = vcmask 254976
    %1175 = vst.msk [vmem:[#allocation2] sm:$0x3] %vm1174, %v1172
    %v1178 = vrot.slane %v1146, 7
    %v1179 = vsel %vm177, %v1178, %v1145
    %1180 = vrot.lane.b32.xlu0 %v1179, 96
    %v1181 = vpop.permute.xlu0 %1180
    %1183 = vst.msk [vmem:[#allocation3] sm:$0x3] %vm1174, %v1181
    // Predicated region
    $region14: #{lstm_forward.1} parent=1 // pred_check
      _
    $region15: #{lstm_forward.1} parent=1 // pred_check_branch
      %1185 = sbr.rel (0) target = $region17
    $region16: #{lstm_forward.1} parent=1 // pred_region
      %s1187 = ssub.s32 256, 256
      %1188 = vsyncadd [#allocation5], %s1187
      %s1189 = sshll.u32 [#allocation4], 4
      %s1190 = int_to_ptr.vmem [resolvable:$true] %s1189
      %1195 = dma.vmem_to_hbm [thread:$0]  %s1190, 256, %s2, [#allocation5], 128, 128, 8
    $region17: #{lstm_forward.1} parent=1 // pred_fallthru
      _
    // Predicated region
    $region18: #{lstm_forward.1} parent=1 // pred_check
      _
    $region19: #{lstm_forward.1} parent=1 // pred_check_branch
      %1197 = sbr.rel (0) target = $region21
    $region20: #{lstm_forward.1} parent=1 // pred_region
      %1198 = dma.done [#allocation5], 256
    $region21: #{lstm_forward.1} parent=1 // pred_fallthru
      _
    %1199 = vsyncpa [#allocation5], 1

</llo_original>
